<compile_context>
chip_gen: v6e
topology: v6e:2x2x1
jax: 0.10.0
libtpu: 0.0.40
codegen_flags: <defaults>
</compile_context>

<pallas_src>
import jax
import jax.numpy as jnp
from jax import lax
from jax.experimental import pallas as pl
from jax.experimental.pallas import tpu as pltpu

EPS = 1e-5   # nn.InstanceNorm2d default eps


def _round_up(x, m):
    return (x + m - 1) // m * m


# ----------------------------------------------------------------------------
# JAX glue: PyTorch F.upsample(mode='bilinear') == bilinear, align_corners=False
# ----------------------------------------------------------------------------
def _bilinear_upsample_nchw(x, out_h, out_w):
    n, c, in_h, in_w = x.shape

    def src_coords(out_size, in_size):
        scale = in_size / out_size
        src = (jnp.arange(out_size, dtype=jnp.float32) + 0.5) * scale - 0.5
        src = jnp.maximum(src, 0.0)
        i0 = jnp.minimum(jnp.floor(src).astype(jnp.int32), in_size - 1)
        i1 = jnp.minimum(i0 + 1, in_size - 1)
        w1 = src - i0.astype(jnp.float32)
        w0 = 1.0 - w1
        return i0, i1, w0, w1

    h0, h1, wh0, wh1 = src_coords(out_h, in_h)
    w0, w1, ww0, ww1 = src_coords(out_w, in_w)

    xh = (x[:, :, h0, :] * wh0[None, None, :, None]
          + x[:, :, h1, :] * wh1[None, None, :, None])
    out = (xh[:, :, :, w0] * ww0[None, None, None, :]
           + xh[:, :, :, w1] * ww1[None, None, None, :])
    return out


# ----------------------------------------------------------------------------
# Pallas kernel factory: conv3x3 -> IN -> ReLU -> conv3x3 -> IN -> residual
# (NB batch elements per grid step, channels-first, flattened-spatial lanes)
# ----------------------------------------------------------------------------
def _make_kernel(H, W, C, Q, GX, EX, GH, EH, CP, NB, cdtype):
    C3 = 3 * C
    Wp = W + 2
    KDIM = 9 * CP
    inv_n = 1.0 / float(H * W)
    # tap shifts in flattened padded-image coordinates (row stride = W + 2)
    shifts = [(dy - 1) * Wp + (dx - 1) for dy in range(3) for dx in range(3)]

    def kernel(xext_ref, mrow_ref, mcol_ref, w1_ref, w2_ref, out_ref,
               h1ext_ref, stack_ref):
        # Unconditional (cheap, ~125 KB) zeroing of the persistent scratch
        # buffers every grid step: guarantees the K-pad rows and conv2 guard
        # lanes are exact zeros on every core, removing the stale-VMEM / NaN
        # hazard flagged in the review.
        h1ext_ref[...] = jnp.zeros((C3, EH), cdtype)
        stack_ref[...] = jnp.zeros((KDIM, Q), cdtype)

        mrow = mrow_ref[...]              # (1, Q) interior mask along lanes
        mcol = mcol_ref[...]              # (Q, 1) interior mask as MXU column
        w1 = w1_ref[...]                  # (C3, KDIM) cdtype
        w2 = w2_ref[...]                  # (C,  KDIM) cdtype

        def instance_norm(y):
            # Masked single-pass statistics on the MXU (idle otherwise):
            # the mask multiply rides inside the matmul, no XLU lane reductions.
            s = jnp.dot(y, mcol, preferred_element_type=jnp.float32)     # (Co,1)
            ss = jnp.dot(y * y, mcol, preferred_element_type=jnp.float32)
            mean = s * inv_n
            var = jnp.maximum(ss * inv_n - mean * mean, 0.0)
            return (y - mean) * lax.rsqrt(var + EPS)

        def conv(load_win, w):
            # Stack the 9 shifted windows along K (tile-aligned row chunks of
            # height C3 at offsets k*CP) and run ONE matmul instead of
            # 9 dots + 8 dependent VPU adds.
            for k in range(9):
                stack_ref[k * CP:k * CP + C3, :] = load_win(shifts[k])
            return jnp.dot(w, stack_ref[...],
                           preferred_element_type=jnp.float32)

        for nb in range(NB):              # NB batch elements per grid step
            # ---- conv1 (bias dropped: cancelled by the affine-free IN) ----
            y1 = conv(lambda s, nb=nb:
                      xext_ref[nb, :, GX + s:GX + s + Q].astype(cdtype), w1)
            h1 = instance_norm(y1)
            # ReLU + zero border/tail lanes: this realizes conv2's zero padding.
            h1p = jnp.maximum(h1, 0.0) * mrow
            h1ext_ref[:, GH:GH + Q] = h1p.astype(cdtype)   # lane-aligned store

            # ---- conv2 (bias dropped as well) ----
            y2 = conv(lambda s: h1ext_ref[:, GH + s:GH + s + Q], w2)
            h2 = instance_norm(y2)

            # residual: x is the first C channels of the padded concat input;
            # non-interior lanes are cropped by the wrapper.
            out_ref[nb] = h2 + xext_ref[nb, :C, GX:GX + Q]

    return kernel


# ----------------------------------------------------------------------------
# Wrapper (NCHW in -> NCHW out, no transposes)
# ----------------------------------------------------------------------------
def refinement_block(x_nchw, hist1_nchw, hist2_nchw, params, *,
                     compute_dtype=jnp.bfloat16, batch_per_step=None):
    x = x_nchw.astype(jnp.float32)
    N, C, H, W = x.shape
    C3 = 3 * C
    cdtype = jnp.dtype(compute_dtype)

    Wp = W + 2
    sp = (H + 2) * Wp                     # flattened padded-image size
    Q = _round_up(sp, 128)                # lane-dense core/output domain
    GX = _round_up(W + 3, 8)              # shrunk input-slab lane guard
    EX = _round_up(Q + 2 * GX, 128)       # extended input slab size
    GH = 128                              # conv2 scratch guard (aligned store)
    EH = Q + 2 * GH
    CP = _round_up(C3, 16)                # tile-aligned K-stack row chunk
    KDIM = 9 * CP

    if batch_per_step is None:
        batch_per_step = 1 if N <= 2 else 2   # keep >=2 grid steps for v7x 2 TCs
    NB = max(1, min(int(batch_per_step), N))
    while N % NB:
        NB -= 1

    # bilinear upsample (align_corners=False) + concat + pad, all in NCHW
    h1u = _bilinear_upsample_nchw(hist1_nchw.astype(jnp.float32), H, W)
    h2u = _bilinear_upsample_nchw(hist2_nchw.astype(jnp.float32), H, W)
    x_cat = jnp.concatenate([x, h1u, h2u], axis=1)                  # (N,3C,H,W)
    x_pad = jnp.pad(x_cat, ((0, 0), (0, 0), (1, 1), (1, 1)))        # (N,3C,H+2,W+2)
    x_ext = jnp.pad(x_pad.reshape(N, C3, sp),
                    ((0, 0), (0, 0), (GX, EX - GX - sp)))           # (N,3C,EX)

    # interior mask over the core domain [0, Q)
    qidx = jnp.arange(Q)
    row = qidx // Wp
    col = qidx % Wp
    interior = ((row >= 1) & (row <= H) & (col >= 1) & (col <= W)
                ).astype(jnp.float32)
    mask_row = interior.reshape(1, Q)
    mask_col = interior.reshape(Q, 1)

    # weights: torch (Cout, Cin, 3, 3) -> K-stacked (Cout, 9*CP), zero-padded
    # columns for the CP alignment.  Biases b1/b2 are intentionally NOT used:
    # they are cancelled exactly by the affine-free InstanceNorm2d.
    def stack_weight(w_oihw):
        cout, cin = int(w_oihw.shape[0]), int(w_oihw.shape[1])
        w = jnp.transpose(w_oihw.astype(jnp.float32), (2, 3, 0, 1))
        w = w.reshape(9, cout, cin)
        w = jnp.pad(w, ((0, 0), (0, 0), (0, CP - cin)))
        return jnp.transpose(w, (1, 0, 2)).reshape(cout, KDIM).astype(cdtype)

    w1s = stack_weight(params["w1"])      # (C3, KDIM)
    w2s = stack_weight(params["w2"])      # (C,  KDIM)

    kernel = _make_kernel(H, W, C, Q, GX, EX, GH, EH, CP, NB, cdtype)

    # generation-aware VMEM ceiling (64 MiB physical on v7x, 128 MiB v5e/v6e)
    cbytes = cdtype.itemsize
    resident = (4 * (2 * NB * C3 * EX + 2 * NB * C * Q + 4 * Q)
                + cbytes * (2 * (C3 + C) * KDIM + C3 * EH + KDIM * Q))
    try:
        phys_vmem = pltpu.get_tpu_info().vmem_capacity_bytes
    except Exception:
        phys_vmem = 64 * 1024 * 1024
    vmem_limit = int(min(int(0.8 * phys_vmem),
                         max(32 * 1024 * 1024, 8 * resident)))
    # TODO(synk): for large H*W (esp. v7x's 64 MiB VMEM) add row-band spatial
    # tiling with a two-pass InstanceNorm instead of whole-image blocks.

    flops = int(2 * N * Q * KDIM * (C3 + C)       # the two stacked-K convs
                + 2 * N * Q * 2 * (C3 + C))       # masked IN statistics dots
    bytes_accessed = int(x_ext.size * 4 + N * C * Q * 4
                         + (w1s.size + w2s.size) * cbytes + 2 * Q * 4)
    cost = pl.CostEstimate(flops=flops,
                           transcendentals=int(N * (C3 + C)),
                           bytes_accessed=bytes_accessed)

    out_flat = pl.pallas_call(
        kernel,
        out_shape=jax.ShapeDtypeStruct((N, C, Q), jnp.float32),
        grid_spec=pltpu.PrefetchScalarGridSpec(
            num_scalar_prefetch=0,
            grid=(N // NB,),
            in_specs=[
                pl.BlockSpec((NB, C3, EX), lambda g: (g, 0, 0)),
                pl.BlockSpec((1, Q), lambda g: (0, 0)),
                pl.BlockSpec((Q, 1), lambda g: (0, 0)),
                pl.BlockSpec((C3, KDIM), lambda g: (0, 0)),
                pl.BlockSpec((C, KDIM), lambda g: (0, 0)),
            ],
            out_specs=pl.BlockSpec((NB, C, Q), lambda g: (g, 0, 0)),
            scratch_shapes=[pltpu.VMEM((C3, EH), cdtype),
                            pltpu.VMEM((KDIM, Q), cdtype)],
        ),
        compiler_params=pltpu.CompilerParams(
            dimension_semantics=("parallel",),
            vmem_limit_bytes=vmem_limit),
        cost_estimate=cost,
    )(x_ext, mask_row, mask_col, w1s, w2s)

    # crop the interior back out (cheap XLA slice + reshape; stays NCHW)
    out = out_flat[:, :, :sp].reshape(N, C, H + 2, W + 2)[:, :, 1:H + 1, 1:W + 1]
    return out


# ----------------------------------------------------------------------------
# Deterministic parameter init (torch layout: Conv2d(3C,3C,3) + Conv2d(3C,C,3))
# ----------------------------------------------------------------------------
def init_params(key, hist_channels):
    C = hist_channels
    C3 = 3 * C
    k1, k2, k3, k4 = jax.random.split(key, 4)
    return {
        "w1": jax.random.normal(k1, (C3, C3, 3, 3), jnp.float32) * 0.1,
        "b1": jax.random.normal(k2, (C3,), jnp.float32) * 0.1,
        "w2": jax.random.normal(k3, (C, C3, 3, 3), jnp.float32) * 0.1,
        "b2": jax.random.normal(k4, (C,), jnp.float32) * 0.1,
    }


# ----------------------------------------------------------------------------
# Pure-JAX reference (for sanity checking the kernel); biases included here —
# they are cancelled by the affine-free InstanceNorm, matching the kernel.
# ----------------------------------------------------------------------------
def ref_forward(x_nchw, hist1_nchw, hist2_nchw, params):
    x = x_nchw.astype(jnp.float32)
    N, C, H, W = x.shape
    C3 = 3 * C
    h1u = _bilinear_upsample_nchw(hist1_nchw.astype(jnp.float32), H, W)
    h2u = _bilinear_upsample_nchw(hist2_nchw.astype(jnp.float32), H, W)
    x_cat = jnp.concatenate([x, h1u, h2u], axis=1)

    def inorm(y):
        m = jnp.mean(y, axis=(2, 3), keepdims=True)
        v = jnp.mean((y - m) ** 2, axis=(2, 3), keepdims=True)
        return (y - m) * lax.rsqrt(v + EPS)

    dn = ("NCHW", "OIHW", "NCHW")
    y = lax.conv_general_dilated(x_cat, params["w1"], (1, 1), "SAME",
                                 dimension_numbers=dn)
    y = y + params["b1"].reshape(1, C3, 1, 1)
    y = jnp.maximum(inorm(y), 0.0)
    y = lax.conv_general_dilated(y, params["w2"], (1, 1), "SAME",
                                 dimension_numbers=dn)
    y = y + params["b2"].reshape(1, C, 1, 1)
    y = inorm(y)
    return x + y


if __name__ == "__main__":
    key = jax.random.PRNGKey(0)
    kx, kh1, kh2, kp = jax.random.split(key, 4)

    hist_channels = 4
    x = jax.random.normal(kx, (2, hist_channels, 16, 16), jnp.float32)
    hist_enc1 = jax.random.normal(kh1, (2, hist_channels, 8, 8), jnp.float32)
    hist_enc2 = jax.random.normal(kh2, (2, hist_channels, 4, 4), jnp.float32)
    params = init_params(kp, hist_channels)

    ref = ref_forward(x, hist_enc1, hist_enc2, params)

    # fast path: bf16 window/weight/scratch storage, f32 MXU accumulation
    out_bf16 = jax.block_until_ready(
        refinement_block(x, hist_enc1, hist_enc2, params))
    assert out_bf16.shape == x.shape
    err_bf16 = float(jnp.max(jnp.abs(out_bf16 - ref)))
    assert err_bf16 < 5e-2, f"bf16 path mismatch: max abs err {err_bf16}"

    # exact path: f32 end-to-end
    out_f32 = jax.block_until_ready(
        refinement_block(x, hist_enc1, hist_enc2, params,
                         compute_dtype=jnp.float32))
    err_f32 = float(jnp.max(jnp.abs(out_f32 - ref)))
    assert err_f32 < 2e-3, f"f32 path mismatch: max abs err {err_f32}"

    # batched grid-step path (NB=2) on N=4
    x4 = jax.random.normal(jax.random.fold_in(kx, 1),
                           (4, hist_channels, 16, 16), jnp.float32)
    h14 = jax.random.normal(jax.random.fold_in(kh1, 1),
                            (4, hist_channels, 8, 8), jnp.float32)
    h24 = jax.random.normal(jax.random.fold_in(kh2, 1),
                            (4, hist_channels, 4, 4), jnp.float32)
    ref4 = ref_forward(x4, h14, h24, params)
    out4 = jax.block_until_ready(
        refinement_block(x4, h14, h24, params, compute_dtype=jnp.float32))
    err4 = float(jnp.max(jnp.abs(out4 - ref4)))
    assert err4 < 2e-3, f"batched path mismatch: max abs err {err4}"

    print("KERNEL_OK")
</pallas_src>

<mosaic_0001>
module attributes {stable_mosaic.version = 11 : i64} {
  func.func @kernel(%arg0: i32, %arg1: memref<1x12x512xf32, #tpu.memory_space<vmem>>, %arg2: memref<1x384xf32, #tpu.memory_space<vmem>>, %arg3: memref<384x1xf32, #tpu.memory_space<vmem>>, %arg4: memref<12x144xbf16, #tpu.memory_space<vmem>>, %arg5: memref<4x144xbf16, #tpu.memory_space<vmem>>, %arg6: memref<1x4x384xf32, #tpu.memory_space<vmem>>, %arg7: memref<12x640xbf16, #tpu.memory_space<vmem>>, %arg8: memref<144x384xbf16, #tpu.memory_space<vmem>>) attributes {dimension_semantics = [#tpu.dimension_semantics<parallel>], iteration_bounds = array<i64: 2>, scalar_prefetch = 0 : i64, scratch_operands = 2 : i64, tpu.core_type = #tpu.core_type<tc>, window_params = [{transform_indices = @transform_0, window_bounds = array<i64: 1, 12, 512>}, {pipeline_mode = #tpu.pipeline_mode<synchronous>, transform_indices = @transform_1, window_bounds = array<i64: 1, 384>}, {pipeline_mode = #tpu.pipeline_mode<synchronous>, transform_indices = @transform_2, window_bounds = array<i64: 384, 1>}, {pipeline_mode = #tpu.pipeline_mode<synchronous>, transform_indices = @transform_3, window_bounds = array<i64: 12, 144>}, {pipeline_mode = #tpu.pipeline_mode<synchronous>, transform_indices = @transform_4, window_bounds = array<i64: 4, 144>}, {transform_indices = @transform_5, window_bounds = array<i64: 1, 4, 384>}]} {
    %cst = arith.constant 0.000000e+00 : bf16
    %0 = vector.broadcast %cst : bf16 to vector<12x640xbf16>
    %c0 = arith.constant 0 : index
    %c0_0 = arith.constant 0 : index
    %1 = vector.load %arg7[%c0, %c0_0] : memref<12x640xbf16, #tpu.memory_space<vmem>>, vector<12x640xbf16>
    tpu.vector_store %arg7[%c0, %c0_0], %0 {strides = array<i32>} : memref<12x640xbf16, #tpu.memory_space<vmem>>, vector<12x640xbf16>,
    %cst_1 = arith.constant 0.000000e+00 : bf16
    %2 = vector.broadcast %cst_1 : bf16 to vector<144x384xbf16>
    %c0_2 = arith.constant 0 : index
    %c0_3 = arith.constant 0 : index
    %3 = vector.load %arg8[%c0_2, %c0_3] : memref<144x384xbf16, #tpu.memory_space<vmem>>, vector<144x384xbf16>
    tpu.vector_store %arg8[%c0_2, %c0_3], %2 {strides = array<i32>} : memref<144x384xbf16, #tpu.memory_space<vmem>>, vector<144x384xbf16>,
    %c0_4 = arith.constant 0 : index
    %c0_5 = arith.constant 0 : index
    %4 = vector.load %arg2[%c0_4, %c0_5] : memref<1x384xf32, #tpu.memory_space<vmem>>, vector<1x384xf32>
    %c0_6 = arith.constant 0 : index
    %c0_7 = arith.constant 0 : index
    %5 = vector.load %arg3[%c0_6, %c0_7] : memref<384x1xf32, #tpu.memory_space<vmem>>, vector<384x1xf32>
    %c0_8 = arith.constant 0 : index
    %c0_9 = arith.constant 0 : index
    %6 = vector.load %arg4[%c0_8, %c0_9] : memref<12x144xbf16, #tpu.memory_space<vmem>>, vector<12x144xbf16>
    %c0_10 = arith.constant 0 : index
    %c0_11 = arith.constant 0 : index
    %7 = vector.load %arg5[%c0_10, %c0_11] : memref<4x144xbf16, #tpu.memory_space<vmem>>, vector<4x144xbf16>
    %c0_12 = arith.constant 0 : index
    %c0_13 = arith.constant 0 : index
    %c5 = arith.constant 5 : index
    %8 = vector.load %arg1[%c0_12, %c0_13, %c5] : memref<1x12x512xf32, #tpu.memory_space<vmem>>, vector<1x12x384xf32>
    %9 = vector.shape_cast %8 : vector<1x12x384xf32> to vector<12x384xf32>
    %10 = arith.truncf %9 : vector<12x384xf32> to vector<12x384xbf16>
    %c0_14 = arith.constant 0 : index
    %c0_15 = arith.constant 0 : index
    %11 = vector.load %arg8[%c0_14, %c0_15] : memref<144x384xbf16, #tpu.memory_space<vmem>>, vector<12x384xbf16>
    tpu.vector_store %arg8[%c0_14, %c0_15], %10 {strides = array<i32>} : memref<144x384xbf16, #tpu.memory_space<vmem>>, vector<12x384xbf16>,
    %c0_16 = arith.constant 0 : index
    %c0_17 = arith.constant 0 : index
    %c6 = arith.constant 6 : index
    %12 = vector.load %arg1[%c0_16, %c0_17, %c6] : memref<1x12x512xf32, #tpu.memory_space<vmem>>, vector<1x12x384xf32>
    %13 = vector.shape_cast %12 : vector<1x12x384xf32> to vector<12x384xf32>
    %14 = arith.truncf %13 : vector<12x384xf32> to vector<12x384xbf16>
    %c16 = arith.constant 16 : index
    %c0_18 = arith.constant 0 : index
    %15 = vector.load %arg8[%c16, %c0_18] : memref<144x384xbf16, #tpu.memory_space<vmem>>, vector<12x384xbf16>
    tpu.vector_store %arg8[%c16, %c0_18], %14 {strides = array<i32>} : memref<144x384xbf16, #tpu.memory_space<vmem>>, vector<12x384xbf16>,
    %c0_19 = arith.constant 0 : index
    %c0_20 = arith.constant 0 : index
    %c7 = arith.constant 7 : index
    %16 = vector.load %arg1[%c0_19, %c0_20, %c7] : memref<1x12x512xf32, #tpu.memory_space<vmem>>, vector<1x12x384xf32>
    %17 = vector.shape_cast %16 : vector<1x12x384xf32> to vector<12x384xf32>
    %18 = arith.truncf %17 : vector<12x384xf32> to vector<12x384xbf16>
    %c32 = arith.constant 32 : index
    %c0_21 = arith.constant 0 : index
    %19 = vector.load %arg8[%c32, %c0_21] : memref<144x384xbf16, #tpu.memory_space<vmem>>, vector<12x384xbf16>
    tpu.vector_store %arg8[%c32, %c0_21], %18 {strides = array<i32>} : memref<144x384xbf16, #tpu.memory_space<vmem>>, vector<12x384xbf16>,
    %c0_22 = arith.constant 0 : index
    %c0_23 = arith.constant 0 : index
    %c23 = arith.constant 23 : index
    %20 = vector.load %arg1[%c0_22, %c0_23, %c23] : memref<1x12x512xf32, #tpu.memory_space<vmem>>, vector<1x12x384xf32>
    %21 = vector.shape_cast %20 : vector<1x12x384xf32> to vector<12x384xf32>
    %22 = arith.truncf %21 : vector<12x384xf32> to vector<12x384xbf16>
    %c48 = arith.constant 48 : index
    %c0_24 = arith.constant 0 : index
    %23 = vector.load %arg8[%c48, %c0_24] : memref<144x384xbf16, #tpu.memory_space<vmem>>, vector<12x384xbf16>
    tpu.vector_store %arg8[%c48, %c0_24], %22 {strides = array<i32>} : memref<144x384xbf16, #tpu.memory_space<vmem>>, vector<12x384xbf16>,
    %c0_25 = arith.constant 0 : index
    %c0_26 = arith.constant 0 : index
    %c24 = arith.constant 24 : index
    %24 = vector.load %arg1[%c0_25, %c0_26, %c24] : memref<1x12x512xf32, #tpu.memory_space<vmem>>, vector<1x12x384xf32>
    %25 = vector.shape_cast %24 : vector<1x12x384xf32> to vector<12x384xf32>
    %26 = arith.truncf %25 : vector<12x384xf32> to vector<12x384xbf16>
    %c64 = arith.constant 64 : index
    %c0_27 = arith.constant 0 : index
    %27 = vector.load %arg8[%c64, %c0_27] : memref<144x384xbf16, #tpu.memory_space<vmem>>, vector<12x384xbf16>
    tpu.vector_store %arg8[%c64, %c0_27], %26 {strides = array<i32>} : memref<144x384xbf16, #tpu.memory_space<vmem>>, vector<12x384xbf16>,
    %c0_28 = arith.constant 0 : index
    %c0_29 = arith.constant 0 : index
    %c25 = arith.constant 25 : index
    %28 = vector.load %arg1[%c0_28, %c0_29, %c25] : memref<1x12x512xf32, #tpu.memory_space<vmem>>, vector<1x12x384xf32>
    %29 = vector.shape_cast %28 : vector<1x12x384xf32> to vector<12x384xf32>
    %30 = arith.truncf %29 : vector<12x384xf32> to vector<12x384xbf16>
    %c80 = arith.constant 80 : index
    %c0_30 = arith.constant 0 : index
    %31 = vector.load %arg8[%c80, %c0_30] : memref<144x384xbf16, #tpu.memory_space<vmem>>, vector<12x384xbf16>
    tpu.vector_store %arg8[%c80, %c0_30], %30 {strides = array<i32>} : memref<144x384xbf16, #tpu.memory_space<vmem>>, vector<12x384xbf16>,
    %c0_31 = arith.constant 0 : index
    %c0_32 = arith.constant 0 : index
    %c41 = arith.constant 41 : index
    %32 = vector.load %arg1[%c0_31, %c0_32, %c41] : memref<1x12x512xf32, #tpu.memory_space<vmem>>, vector<1x12x384xf32>
    %33 = vector.shape_cast %32 : vector<1x12x384xf32> to vector<12x384xf32>
    %34 = arith.truncf %33 : vector<12x384xf32> to vector<12x384xbf16>
    %c96 = arith.constant 96 : index
    %c0_33 = arith.constant 0 : index
    %35 = vector.load %arg8[%c96, %c0_33] : memref<144x384xbf16, #tpu.memory_space<vmem>>, vector<12x384xbf16>
    tpu.vector_store %arg8[%c96, %c0_33], %34 {strides = array<i32>} : memref<144x384xbf16, #tpu.memory_space<vmem>>, vector<12x384xbf16>,
    %c0_34 = arith.constant 0 : index
    %c0_35 = arith.constant 0 : index
    %c42 = arith.constant 42 : index
    %36 = vector.load %arg1[%c0_34, %c0_35, %c42] : memref<1x12x512xf32, #tpu.memory_space<vmem>>, vector<1x12x384xf32>
    %37 = vector.shape_cast %36 : vector<1x12x384xf32> to vector<12x384xf32>
    %38 = arith.truncf %37 : vector<12x384xf32> to vector<12x384xbf16>
    %c112 = arith.constant 112 : index
    %c0_36 = arith.constant 0 : index
    %39 = vector.load %arg8[%c112, %c0_36] : memref<144x384xbf16, #tpu.memory_space<vmem>>, vector<12x384xbf16>
    tpu.vector_store %arg8[%c112, %c0_36], %38 {strides = array<i32>} : memref<144x384xbf16, #tpu.memory_space<vmem>>, vector<12x384xbf16>,
    %c0_37 = arith.constant 0 : index
    %c0_38 = arith.constant 0 : index
    %c43 = arith.constant 43 : index
    %40 = vector.load %arg1[%c0_37, %c0_38, %c43] : memref<1x12x512xf32, #tpu.memory_space<vmem>>, vector<1x12x384xf32>
    %41 = vector.shape_cast %40 : vector<1x12x384xf32> to vector<12x384xf32>
    %42 = arith.truncf %41 : vector<12x384xf32> to vector<12x384xbf16>
    %c128 = arith.constant 128 : index
    %c0_39 = arith.constant 0 : index
    %43 = vector.load %arg8[%c128, %c0_39] : memref<144x384xbf16, #tpu.memory_space<vmem>>, vector<12x384xbf16>
    tpu.vector_store %arg8[%c128, %c0_39], %42 {strides = array<i32>} : memref<144x384xbf16, #tpu.memory_space<vmem>>, vector<12x384xbf16>,
    %c0_40 = arith.constant 0 : index
    %c0_41 = arith.constant 0 : index
    %44 = vector.load %arg8[%c0_40, %c0_41] : memref<144x384xbf16, #tpu.memory_space<vmem>>, vector<144x384xbf16>
    %cst_42 = arith.constant dense<0.000000e+00> : vector<12x384xf32>
    %45 = tpu.matmul %6, %44, %cst_42 {dimension_numbers = #tpu.dot_dimension_numbers<[1], [0], [0], [1], [0, 0, 1, 1], [], []>} : vector<12x144xbf16>, vector<144x384xbf16>, vector<12x384xf32> -> vector<12x384xf32>
    %cst_43 = arith.constant dense<0.000000e+00> : vector<12x1xf32>
    %46 = tpu.matmul %45, %5, %cst_43 {dimension_numbers = #tpu.dot_dimension_numbers<[1], [0], [0], [1], [0, 0, 1, 1], [], []>} : vector<12x384xf32>, vector<384x1xf32>, vector<12x1xf32> -> vector<12x1xf32>
    %47 = arith.mulf %45, %45 : vector<12x384xf32>
    %cst_44 = arith.constant dense<0.000000e+00> : vector<12x1xf32>
    %48 = tpu.matmul %47, %5, %cst_44 {dimension_numbers = #tpu.dot_dimension_numbers<[1], [0], [0], [1], [0, 0, 1, 1], [], []>} : vector<12x384xf32>, vector<384x1xf32>, vector<12x1xf32> -> vector<12x1xf32>
    %cst_45 = arith.constant 3.906250e-03 : f32
    %49 = vector.broadcast %cst_45 : f32 to vector<12x1xf32>
    %50 = arith.mulf %46, %49 : vector<12x1xf32>
    %cst_46 = arith.constant 3.906250e-03 : f32
    %51 = vector.broadcast %cst_46 : f32 to vector<12x1xf32>
    %52 = arith.mulf %48, %51 : vector<12x1xf32>
    %53 = arith.mulf %50, %50 : vector<12x1xf32>
    %54 = arith.subf %52, %53 : vector<12x1xf32>
    %cst_47 = arith.constant 0.000000e+00 : f32
    %55 = vector.broadcast %cst_47 : f32 to vector<12x1xf32>
    %56 = arith.maximumf %54, %55 : vector<12x1xf32>
    %57 = vector.broadcast %50 : vector<12x1xf32> to vector<12x384xf32>
    %58 = arith.subf %45, %57 : vector<12x384xf32>
    %cst_48 = arith.constant 9.99999974E-6 : f32
    %59 = vector.broadcast %cst_48 : f32 to vector<12x1xf32>
    %60 = arith.addf %56, %59 : vector<12x1xf32>
    %61 = math.rsqrt %60 : vector<12x1xf32>
    %62 = vector.broadcast %61 : vector<12x1xf32> to vector<12x384xf32>
    %63 = arith.mulf %58, %62 : vector<12x384xf32>
    %cst_49 = arith.constant 0.000000e+00 : f32
    %64 = vector.broadcast %cst_49 : f32 to vector<12x384xf32>
    %65 = arith.maximumf %63, %64 : vector<12x384xf32>
    %66 = vector.broadcast %4 : vector<1x384xf32> to vector<12x384xf32>
    %67 = arith.mulf %65, %66 : vector<12x384xf32>
    %68 = arith.truncf %67 : vector<12x384xf32> to vector<12x384xbf16>
    %c0_50 = arith.constant 0 : index
    %c128_51 = arith.constant 128 : index
    %69 = vector.load %arg7[%c0_50, %c128_51] : memref<12x640xbf16, #tpu.memory_space<vmem>>, vector<12x384xbf16>
    tpu.vector_store %arg7[%c0_50, %c128_51], %68 {strides = array<i32>} : memref<12x640xbf16, #tpu.memory_space<vmem>>, vector<12x384xbf16>,
    %c0_52 = arith.constant 0 : index
    %c109 = arith.constant 109 : index
    %70 = vector.load %arg7[%c0_52, %c109] : memref<12x640xbf16, #tpu.memory_space<vmem>>, vector<12x384xbf16>
    %c0_53 = arith.constant 0 : index
    %c0_54 = arith.constant 0 : index
    %71 = vector.load %arg8[%c0_53, %c0_54] : memref<144x384xbf16, #tpu.memory_space<vmem>>, vector<12x384xbf16>
    tpu.vector_store %arg8[%c0_53, %c0_54], %70 {strides = array<i32>} : memref<144x384xbf16, #tpu.memory_space<vmem>>, vector<12x384xbf16>,
    %c0_55 = arith.constant 0 : index
    %c110 = arith.constant 110 : index
    %72 = vector.load %arg7[%c0_55, %c110] : memref<12x640xbf16, #tpu.memory_space<vmem>>, vector<12x384xbf16>
    %c16_56 = arith.constant 16 : index
    %c0_57 = arith.constant 0 : index
    %73 = vector.load %arg8[%c16_56, %c0_57] : memref<144x384xbf16, #tpu.memory_space<vmem>>, vector<12x384xbf16>
    tpu.vector_store %arg8[%c16_56, %c0_57], %72 {strides = array<i32>} : memref<144x384xbf16, #tpu.memory_space<vmem>>, vector<12x384xbf16>,
    %c0_58 = arith.constant 0 : index
    %c111 = arith.constant 111 : index
    %74 = vector.load %arg7[%c0_58, %c111] : memref<12x640xbf16, #tpu.memory_space<vmem>>, vector<12x384xbf16>
    %c32_59 = arith.constant 32 : index
    %c0_60 = arith.constant 0 : index
    %75 = vector.load %arg8[%c32_59, %c0_60] : memref<144x384xbf16, #tpu.memory_space<vmem>>, vector<12x384xbf16>
    tpu.vector_store %arg8[%c32_59, %c0_60], %74 {strides = array<i32>} : memref<144x384xbf16, #tpu.memory_space<vmem>>, vector<12x384xbf16>,
    %c0_61 = arith.constant 0 : index
    %c127 = arith.constant 127 : index
    %76 = vector.load %arg7[%c0_61, %c127] : memref<12x640xbf16, #tpu.memory_space<vmem>>, vector<12x384xbf16>
    %c48_62 = arith.constant 48 : index
    %c0_63 = arith.constant 0 : index
    %77 = vector.load %arg8[%c48_62, %c0_63] : memref<144x384xbf16, #tpu.memory_space<vmem>>, vector<12x384xbf16>
    tpu.vector_store %arg8[%c48_62, %c0_63], %76 {strides = array<i32>} : memref<144x384xbf16, #tpu.memory_space<vmem>>, vector<12x384xbf16>,
    %c0_64 = arith.constant 0 : index
    %c128_65 = arith.constant 128 : index
    %78 = vector.load %arg7[%c0_64, %c128_65] : memref<12x640xbf16, #tpu.memory_space<vmem>>, vector<12x384xbf16>
    %c64_66 = arith.constant 64 : index
    %c0_67 = arith.constant 0 : index
    %79 = vector.load %arg8[%c64_66, %c0_67] : memref<144x384xbf16, #tpu.memory_space<vmem>>, vector<12x384xbf16>
    tpu.vector_store %arg8[%c64_66, %c0_67], %78 {strides = array<i32>} : memref<144x384xbf16, #tpu.memory_space<vmem>>, vector<12x384xbf16>,
    %c0_68 = arith.constant 0 : index
    %c129 = arith.constant 129 : index
    %80 = vector.load %arg7[%c0_68, %c129] : memref<12x640xbf16, #tpu.memory_space<vmem>>, vector<12x384xbf16>
    %c80_69 = arith.constant 80 : index
    %c0_70 = arith.constant 0 : index
    %81 = vector.load %arg8[%c80_69, %c0_70] : memref<144x384xbf16, #tpu.memory_space<vmem>>, vector<12x384xbf16>
    tpu.vector_store %arg8[%c80_69, %c0_70], %80 {strides = array<i32>} : memref<144x384xbf16, #tpu.memory_space<vmem>>, vector<12x384xbf16>,
    %c0_71 = arith.constant 0 : index
    %c145 = arith.constant 145 : index
    %82 = vector.load %arg7[%c0_71, %c145] : memref<12x640xbf16, #tpu.memory_space<vmem>>, vector<12x384xbf16>
    %c96_72 = arith.constant 96 : index
    %c0_73 = arith.constant 0 : index
    %83 = vector.load %arg8[%c96_72, %c0_73] : memref<144x384xbf16, #tpu.memory_space<vmem>>, vector<12x384xbf16>
    tpu.vector_store %arg8[%c96_72, %c0_73], %82 {strides = array<i32>} : memref<144x384xbf16, #tpu.memory_space<vmem>>, vector<12x384xbf16>,
    %c0_74 = arith.constant 0 : index
    %c146 = arith.constant 146 : index
    %84 = vector.load %arg7[%c0_74, %c146] : memref<12x640xbf16, #tpu.memory_space<vmem>>, vector<12x384xbf16>
    %c112_75 = arith.constant 112 : index
    %c0_76 = arith.constant 0 : index
    %85 = vector.load %arg8[%c112_75, %c0_76] : memref<144x384xbf16, #tpu.memory_space<vmem>>, vector<12x384xbf16>
    tpu.vector_store %arg8[%c112_75, %c0_76], %84 {strides = array<i32>} : memref<144x384xbf16, #tpu.memory_space<vmem>>, vector<12x384xbf16>,
    %c0_77 = arith.constant 0 : index
    %c147 = arith.constant 147 : index
    %86 = vector.load %arg7[%c0_77, %c147] : memref<12x640xbf16, #tpu.memory_space<vmem>>, vector<12x384xbf16>
    %c128_78 = arith.constant 128 : index
    %c0_79 = arith.constant 0 : index
    %87 = vector.load %arg8[%c128_78, %c0_79] : memref<144x384xbf16, #tpu.memory_space<vmem>>, vector<12x384xbf16>
    tpu.vector_store %arg8[%c128_78, %c0_79], %86 {strides = array<i32>} : memref<144x384xbf16, #tpu.memory_space<vmem>>, vector<12x384xbf16>,
    %c0_80 = arith.constant 0 : index
    %c0_81 = arith.constant 0 : index
    %88 = vector.load %arg8[%c0_80, %c0_81] : memref<144x384xbf16, #tpu.memory_space<vmem>>, vector<144x384xbf16>
    %cst_82 = arith.constant dense<0.000000e+00> : vector<4x384xf32>
    %89 = tpu.matmul %7, %88, %cst_82 {dimension_numbers = #tpu.dot_dimension_numbers<[1], [0], [0], [1], [0, 0, 1, 1], [], []>} : vector<4x144xbf16>, vector<144x384xbf16>, vector<4x384xf32> -> vector<4x384xf32>
    %cst_83 = arith.constant dense<0.000000e+00> : vector<4x1xf32>
    %90 = tpu.matmul %89, %5, %cst_83 {dimension_numbers = #tpu.dot_dimension_numbers<[1], [0], [0], [1], [0, 0, 1, 1], [], []>} : vector<4x384xf32>, vector<384x1xf32>, vector<4x1xf32> -> vector<4x1xf32>
    %91 = arith.mulf %89, %89 : vector<4x384xf32>
    %cst_84 = arith.constant dense<0.000000e+00> : vector<4x1xf32>
    %92 = tpu.matmul %91, %5, %cst_84 {dimension_numbers = #tpu.dot_dimension_numbers<[1], [0], [0], [1], [0, 0, 1, 1], [], []>} : vector<4x384xf32>, vector<384x1xf32>, vector<4x1xf32> -> vector<4x1xf32>
    %cst_85 = arith.constant 3.906250e-03 : f32
    %93 = vector.broadcast %cst_85 : f32 to vector<4x1xf32>
    %94 = arith.mulf %90, %93 : vector<4x1xf32>
    %cst_86 = arith.constant 3.906250e-03 : f32
    %95 = vector.broadcast %cst_86 : f32 to vector<4x1xf32>
    %96 = arith.mulf %92, %95 : vector<4x1xf32>
    %97 = arith.mulf %94, %94 : vector<4x1xf32>
    %98 = arith.subf %96, %97 : vector<4x1xf32>
    %cst_87 = arith.constant 0.000000e+00 : f32
    %99 = vector.broadcast %cst_87 : f32 to vector<4x1xf32>
    %100 = arith.maximumf %98, %99 : vector<4x1xf32>
    %101 = vector.broadcast %94 : vector<4x1xf32> to vector<4x384xf32>
    %102 = arith.subf %89, %101 : vector<4x384xf32>
    %cst_88 = arith.constant 9.99999974E-6 : f32
    %103 = vector.broadcast %cst_88 : f32 to vector<4x1xf32>
    %104 = arith.addf %100, %103 : vector<4x1xf32>
    %105 = math.rsqrt %104 : vector<4x1xf32>
    %106 = vector.broadcast %105 : vector<4x1xf32> to vector<4x384xf32>
    %107 = arith.mulf %102, %106 : vector<4x384xf32>
    %c0_89 = arith.constant 0 : index
    %c0_90 = arith.constant 0 : index
    %c24_91 = arith.constant 24 : index
    %108 = vector.load %arg1[%c0_89, %c0_90, %c24_91] : memref<1x12x512xf32, #tpu.memory_space<vmem>>, vector<1x4x384xf32>
    %109 = vector.shape_cast %108 : vector<1x4x384xf32> to vector<4x384xf32>
    %110 = arith.addf %107, %109 : vector<4x384xf32>
    %c0_92 = arith.constant 0 : index
    %c0_93 = arith.constant 0 : index
    %c0_94 = arith.constant 0 : index
    %111 = vector.load %arg6[%c0_92, %c0_93, %c0_94] : memref<1x4x384xf32, #tpu.memory_space<vmem>>, vector<1x4x384xf32>
    %112 = vector.shape_cast %111 : vector<1x4x384xf32> to vector<4x384xf32>
    %113 = vector.shape_cast %110 : vector<4x384xf32> to vector<1x4x384xf32>
    tpu.vector_store %arg6[%c0_92, %c0_93, %c0_94], %113 {strides = array<i32>} : memref<1x4x384xf32, #tpu.memory_space<vmem>>, vector<1x4x384xf32>,
    return
  }
  func.func @transform_0(%arg0: i32) -> (i32, i32, i32) {
    %c0_i32 = arith.constant 0 : i32
    %c0_i32_0 = arith.constant 0 : i32
    %c0_i32_1 = arith.constant 0 : i32
    return %arg0, %c0_i32, %c0_i32_0 : i32, i32, i32
  }
  func.func @transform_1(%arg0: i32) -> (i32, i32) {
    %c0_i32 = arith.constant 0 : i32
    %c0_i32_0 = arith.constant 0 : i32
    %c0_i32_1 = arith.constant 0 : i32
    return %c0_i32, %c0_i32_0 : i32, i32
  }
  func.func @transform_2(%arg0: i32) -> (i32, i32) {
    %c0_i32 = arith.constant 0 : i32
    %c0_i32_0 = arith.constant 0 : i32
    %c0_i32_1 = arith.constant 0 : i32
    return %c0_i32, %c0_i32_0 : i32, i32
  }
  func.func @transform_3(%arg0: i32) -> (i32, i32) {
    %c0_i32 = arith.constant 0 : i32
    %c0_i32_0 = arith.constant 0 : i32
    %c0_i32_1 = arith.constant 0 : i32
    return %c0_i32, %c0_i32_0 : i32, i32
  }
  func.func @transform_4(%arg0: i32) -> (i32, i32) {
    %c0_i32 = arith.constant 0 : i32
    %c0_i32_0 = arith.constant 0 : i32
    %c0_i32_1 = arith.constant 0 : i32
    return %c0_i32, %c0_i32_0 : i32, i32
  }
  func.func @transform_5(%arg0: i32) -> (i32, i32, i32) {
    %c0_i32 = arith.constant 0 : i32
    %c0_i32_0 = arith.constant 0 : i32
    %c0_i32_1 = arith.constant 0 : i32
    return %arg0, %c0_i32, %c0_i32_0 : i32, i32, i32
  }
}

</mosaic_0001>

<llo_original>
// kernel: tpu_custom_call.1
$region0: #{tpu_custom_call.1}
  #allocation0 [shape = 'u32[]', space=smem, size = 0x4, offset = 0x4, fixed_abs, tag = 'smem constant byte address 0x4 - core index']
  #allocation1 [shape = 'u32[144,128]{1,0:T(1,128)}', space=vmem, size = 0x12000, scoped, tag = 'internal scratch']
  #allocation2 [shape = 'bf16[12,640]{1,0:T(8,128)(2,1)}', space=vmem, size = 0x5000, scoped, tag = 'scratch operand']
  #allocation3 [shape = 'bf16[144,384]{1,0:T(8,128)(2,1)}', space=vmem, size = 0x1b000, scoped, tag = 'scratch operand']
  %s0 = inlined_call_operand.vmem [shape: f32[2,12,512], index: 0, kind: input, shape index: {}]
  %s1 = inlined_call_operand.vmem [shape: f32[1,384], index: 1, kind: input, shape index: {}]
  %s2 = inlined_call_operand.vmem [shape: f32[384,1], index: 2, kind: input, shape index: {}]
  %s3 = inlined_call_operand.vmem [shape: bf16[12,144], index: 3, kind: input, shape index: {}]
  %s4 = inlined_call_operand.vmem [shape: bf16[4,144], index: 4, kind: input, shape index: {}]
  %s5 = inlined_call_operand.hbm [shape: f32[2,4,384], index: 5, kind: output, shape index: {}]
  %s6 = sld [smem:[#allocation0]]
  $region53: #{tpu_custom_call.1} parent=0
    _
  %s8 = ssub.s32 1, %s6
  %s9 = scalar_select 0, %s8, %s6
  $region1: #{tpu_custom_call.1} parent=0
    #allocation4 [shape = 'u8[12288]{0}', space=vmem, size = 0x3000, scoped, tag = 'output window, operand 0']
    #allocation5 [shape = 's32[2]{0}', space=sflag, size = 0x8, scoped, tag = 'scoped memory for tpu_custom_call.1']
    %10 = vsyncpa [#allocation5], 0
    %s11 = scalar_lea.sflag [#allocation5], 1
    %12 = vsyncpa %s11, 0
    loop: start=0, step=1, limit=4
    $region2: #{tpu_custom_call.1} parent=1 // loop_pre_header
      _
    $region3: #{tpu_custom_call.1} parent=1 // loop_header
      %s14 = sphi 0, %s18
      %p15 = scmp.ge.s32.totalorder %s14, 4
      %s24 = sphi 0, %s26
      %s27 = sphi 0, %s24
      %s28 = sphi 0, %s27
      %s44 = sphi 0, %s28
      %s48 = sphi 0, %s48
      %s50 = sphi 0, %s48
      %s51 = sphi 0, %s50
      %s65 = sphi 0, %s51
      %s69 = sphi 0, %s69
      %s71 = sphi 0, %s69
      %s72 = sphi 0, %s71
      %s86 = sphi 0, %s72
      %s90 = sphi 0, %s90
      %s92 = sphi 0, %s90
      %s93 = sphi 0, %s92
      %s107 = sphi 0, %s93
      %s111 = sphi 0, %s111
      %s113 = sphi 0, %s111
      %s114 = sphi 0, %s113
      %s128 = sphi 0, %s114
      %s134 = sphi 0, %s136
      %s137 = sphi 0, %s134
      %s138 = sphi 0, %s137
      %s154 = sphi 0, %s138
    $region4: #{tpu_custom_call.1} parent=1 // loop_header_branch
      %17 = sbr.rel (%p15) target = $region8
    $region5: #{tpu_custom_call.1} parent=1 // loop_body
      %s19 = ssub.s32 %s14, 1
      %s20 = ssub.s32 %s14, 2
      %s21 = sadd.s32 %s14, 1
      %s22 = ssub.s32 %s14, %s21
      %p23 = scmp.eq.s32.totalorder %s22, 0
      %s25 = sadd.s32 %s24, 1
      %s26 = scalar_select %p23, %s24, %s25
      %p29 = pneg %p23
      %p30 = scmp.eq.s32.totalorder %s14, 1
      %p31 = por %p29, %p30
      %p32 = scmp.ne.s32.totalorder %s24, %s27
      %p33 = scmp.eq.s32.totalorder %s14, 0
      %p34 = por %p32, %p33
      %p35 = scmp.ne.s32.totalorder %s24, %s27
      %p36 = scmp.eq.s32.totalorder %s19, 1
      %p37 = por %p35, %p36
      %p38 = scmp.ne.s32.totalorder %s27, %s28
      %p39 = scmp.eq.s32.totalorder %s19, 0
      %p40 = por %p38, %p39
      %p41 = scmp.ne.s32.totalorder %s27, %s28
      %p42 = scmp.eq.s32.totalorder %s20, 1
      %p43 = por %p41, %p42
      %p45 = scmp.ne.s32.totalorder %s28, %s44
      %p46 = scmp.eq.s32.totalorder %s20, 0
      %p47 = por %p45, %p46
      %s49 = sadd.s32 %s48, 1
      %p52 = scmp.eq.s32.totalorder %s14, 1
      %p53 = scmp.ne.s32.totalorder %s48, %s50
      %p54 = scmp.eq.s32.totalorder %s14, 0
      %p55 = por %p53, %p54
      %p56 = scmp.ne.s32.totalorder %s48, %s50
      %p57 = scmp.eq.s32.totalorder %s19, 1
      %p58 = por %p56, %p57
      %p59 = scmp.ne.s32.totalorder %s50, %s51
      %p60 = scmp.eq.s32.totalorder %s19, 0
      %p61 = por %p59, %p60
      %p62 = scmp.ne.s32.totalorder %s50, %s51
      %p63 = scmp.eq.s32.totalorder %s20, 1
      %p64 = por %p62, %p63
      %p66 = scmp.ne.s32.totalorder %s51, %s65
      %p67 = scmp.eq.s32.totalorder %s20, 0
      %p68 = por %p66, %p67
      %s70 = sadd.s32 %s69, 1
      %p73 = scmp.eq.s32.totalorder %s14, 1
      %p74 = scmp.ne.s32.totalorder %s69, %s71
      %p75 = scmp.eq.s32.totalorder %s14, 0
      %p76 = por %p74, %p75
      %p77 = scmp.ne.s32.totalorder %s69, %s71
      %p78 = scmp.eq.s32.totalorder %s19, 1
      %p79 = por %p77, %p78
      %p80 = scmp.ne.s32.totalorder %s71, %s72
      %p81 = scmp.eq.s32.totalorder %s19, 0
      %p82 = por %p80, %p81
      %p83 = scmp.ne.s32.totalorder %s71, %s72
      %p84 = scmp.eq.s32.totalorder %s20, 1
      %p85 = por %p83, %p84
      %p87 = scmp.ne.s32.totalorder %s72, %s86
      %p88 = scmp.eq.s32.totalorder %s20, 0
      %p89 = por %p87, %p88
      %s91 = sadd.s32 %s90, 1
      %p94 = scmp.eq.s32.totalorder %s14, 1
      %p95 = scmp.ne.s32.totalorder %s90, %s92
      %p96 = scmp.eq.s32.totalorder %s14, 0
      %p97 = por %p95, %p96
      %p98 = scmp.ne.s32.totalorder %s90, %s92
      %p99 = scmp.eq.s32.totalorder %s19, 1
      %p100 = por %p98, %p99
      %p101 = scmp.ne.s32.totalorder %s92, %s93
      %p102 = scmp.eq.s32.totalorder %s19, 0
      %p103 = por %p101, %p102
      %p104 = scmp.ne.s32.totalorder %s92, %s93
      %p105 = scmp.eq.s32.totalorder %s20, 1
      %p106 = por %p104, %p105
      %p108 = scmp.ne.s32.totalorder %s93, %s107
      %p109 = scmp.eq.s32.totalorder %s20, 0
      %p110 = por %p108, %p109
      %s112 = sadd.s32 %s111, 1
      %p115 = scmp.eq.s32.totalorder %s14, 1
      %p116 = scmp.ne.s32.totalorder %s111, %s113
      %p117 = scmp.eq.s32.totalorder %s14, 0
      %p118 = por %p116, %p117
      %p119 = scmp.ne.s32.totalorder %s111, %s113
      %p120 = scmp.eq.s32.totalorder %s19, 1
      %p121 = por %p119, %p120
      %p122 = scmp.ne.s32.totalorder %s113, %s114
      %p123 = scmp.eq.s32.totalorder %s19, 0
      %p124 = por %p122, %p123
      %p125 = scmp.ne.s32.totalorder %s113, %s114
      %p126 = scmp.eq.s32.totalorder %s20, 1
      %p127 = por %p125, %p126
      %p129 = scmp.ne.s32.totalorder %s114, %s128
      %p130 = scmp.eq.s32.totalorder %s20, 0
      %p131 = por %p129, %p130
      %s132 = ssub.s32 %s14, %s21
      %p133 = scmp.eq.s32.totalorder %s132, 0
      %s135 = sadd.s32 %s134, 1
      %s136 = scalar_select %p133, %s134, %s135
      %p139 = pneg %p133
      %p140 = scmp.eq.s32.totalorder %s14, 1
      %p141 = por %p139, %p140
      %p142 = scmp.ne.s32.totalorder %s134, %s137
      %p143 = scmp.eq.s32.totalorder %s14, 0
      %p144 = por %p142, %p143
      %p145 = scmp.ne.s32.totalorder %s134, %s137
      %p146 = scmp.eq.s32.totalorder %s19, 1
      %p147 = por %p145, %p146
      %p148 = scmp.ne.s32.totalorder %s137, %s138
      %p149 = scmp.eq.s32.totalorder %s19, 0
      %p150 = por %p148, %p149
      %p151 = scmp.ne.s32.totalorder %s137, %s138
      %p152 = scmp.eq.s32.totalorder %s20, 1
      %p153 = por %p151, %p152
      %p155 = scmp.ne.s32.totalorder %s138, %s154
      %p156 = scmp.eq.s32.totalorder %s20, 0
      %p157 = por %p155, %p156
      %p158 = scmp.le.s32.totalorder 1, %s14
      %p159 = scmp.lt.s32.totalorder %s14, 3
      %p160 = pnand %p158, %p159
      %p161 = pneg %p160
      // Predicated region
      $region9: #{tpu_custom_call.1} parent=5 // pred_check
        _
      $region10: #{tpu_custom_call.1} parent=5 // pred_check_branch
        %163 = sbr.rel (%p160) target = $region12
      $region11: #{tpu_custom_call.1} parent=5 // pred_region
        %s164 = ssub.s32 %s14, 1
        // Predicated region
        $region13: #{tpu_custom_call.1} parent=11 // pred_check
          %p165 = pneg %p61
        $region14: #{tpu_custom_call.1} parent=11 // pred_check_branch
          %167 = sbr.rel (%p165) target = $region16
        $region15: #{tpu_custom_call.1} parent=11 // pred_region
          _
        $region16: #{tpu_custom_call.1} parent=11 // pred_fallthru
          _
        // Predicated region
        $region17: #{tpu_custom_call.1} parent=11 // pred_check
          %p168 = pneg %p82
        $region18: #{tpu_custom_call.1} parent=11 // pred_check_branch
          %170 = sbr.rel (%p168) target = $region20
        $region19: #{tpu_custom_call.1} parent=11 // pred_region
          _
        $region20: #{tpu_custom_call.1} parent=11 // pred_fallthru
          _
        // Predicated region
        $region21: #{tpu_custom_call.1} parent=11 // pred_check
          %p171 = pneg %p103
        $region22: #{tpu_custom_call.1} parent=11 // pred_check_branch
          %173 = sbr.rel (%p171) target = $region24
        $region23: #{tpu_custom_call.1} parent=11 // pred_region
          _
        $region24: #{tpu_custom_call.1} parent=11 // pred_fallthru
          _
        // Predicated region
        $region25: #{tpu_custom_call.1} parent=11 // pred_check
          %p174 = pneg %p124
        $region26: #{tpu_custom_call.1} parent=11 // pred_check_branch
          %176 = sbr.rel (%p174) target = $region28
        $region27: #{tpu_custom_call.1} parent=11 // pred_region
          _
        $region28: #{tpu_custom_call.1} parent=11 // pred_fallthru
          _
      $region12: #{tpu_custom_call.1} parent=5 // pred_fallthru
        _
      %p177 = scmp.lt.s32.totalorder %s14, 2
      // Predicated region
      $region29: #{tpu_custom_call.1} parent=5 // pred_check
        %p178 = pneg %p177
      $region30: #{tpu_custom_call.1} parent=5 // pred_check_branch
        %180 = sbr.rel (%p178) target = $region32
      $region31: #{tpu_custom_call.1} parent=5 // pred_region
        // Predicated region
        $region33: #{tpu_custom_call.1} parent=31 // pred_check
          %p181 = pneg %p34
        $region34: #{tpu_custom_call.1} parent=31 // pred_check_branch
          %183 = sbr.rel (%p181) target = $region36
        $region35: #{tpu_custom_call.1} parent=31 // pred_region
          %p184 = scmp.lt.s32.totalorder %s14, 1
          %s185 = scalar_select %p184, %s14, 1
          %s186 = smul.addr %s185, 8
          %s187 = smul.addr %s186, 8
          %s188 = scalar_lea.vmem %s0, %s187
        $region36: #{tpu_custom_call.1} parent=31 // pred_fallthru
          _
      $region32: #{tpu_custom_call.1} parent=5 // pred_fallthru
        _
      %p189 = scmp.le.s32.totalorder 1, %s14
      %p190 = scmp.lt.s32.totalorder %s14, 3
      %p191 = pnand %p189, %p190
      %p192 = pneg %p191
      // Predicated region
      $region37: #{tpu_custom_call.1} parent=5 // pred_check
        _
      $region38: #{tpu_custom_call.1} parent=5 // pred_check_branch
        %194 = sbr.rel (%p191) target = $region40
      $region39: #{tpu_custom_call.1} parent=5 // pred_region
        %s195 = ssub.s32 %s14, 1
        %p196 = scmp.lt.s32.totalorder %s19, 1
        %s197 = scalar_select %p196, %s19, 1
        %s198 = smul.addr %s197, 8
        %s199 = smul.addr %s198, 8
        %s200 = scalar_lea.vmem %s0, %s199
        %p201 = pneg %p40
        %p202 = pneg %p37
        %p203 = pneg %p61
        %p204 = pneg %p58
        %p205 = pneg %p82
        %p206 = pneg %p79
        %p207 = pneg %p103
        %p208 = pneg %p100
        %p209 = pneg %p124
        %p210 = pneg %p121
        %p211 = pneg %p150
        %p212 = pneg %p147
        %s213 = sand.u32 %s137, 1
        %s214 = scalar_lea.sflag [#allocation5], %s213
        %s215 = sand.u32 %s137, 1
        %s216 = smul.addr %s215, 12
        %s217 = scalar_lea.vmem [#allocation4], %s216
        %p218 = scmp.lt.s32.totalorder %s19, 1
        %s219 = scalar_select %p218, %s19, 1
        %s220 = smul.addr %s219, 8
        %s221 = smul.addr %s220, 8
        %s222 = scalar_lea.vmem %s0, %s221
        %224 = vst [vmem:[#allocation2] sm:$0xff] 0
        %225 = vst [vmem:[#allocation2 + $0x8] sm:$0xff] 0
        %226 = vst [vmem:[#allocation2 + $0x10] sm:$0xf] 0
        %227 = vst [vmem:[#allocation2 + $0x14] sm:$0x33] 0
        %228 = vst [vmem:[#allocation2 + $0x1c] sm:$0x33] 0
        %229 = vst [vmem:[#allocation2 + $0x24] sm:$0x3] 0
        %230 = vst [vmem:[#allocation3] sm:$0xff] 0
        %231 = vst [vmem:[#allocation3 + $0x8] sm:$0xf] 0
        %232 = vst [vmem:[#allocation3 + $0xc] sm:$0xff] 0
        %233 = vst [vmem:[#allocation3 + $0x14] sm:$0xf] 0
        %234 = vst [vmem:[#allocation3 + $0x18] sm:$0xff] 0
        %235 = vst [vmem:[#allocation3 + $0x20] sm:$0xf] 0
        %236 = vst [vmem:[#allocation3 + $0x24] sm:$0xff] 0
        %237 = vst [vmem:[#allocation3 + $0x2c] sm:$0xf] 0
        %238 = vst [vmem:[#allocation3 + $0x30] sm:$0xff] 0
        %239 = vst [vmem:[#allocation3 + $0x38] sm:$0xf] 0
        %240 = vst [vmem:[#allocation3 + $0x3c] sm:$0xff] 0
        %241 = vst [vmem:[#allocation3 + $0x44] sm:$0xf] 0
        %242 = vst [vmem:[#allocation3 + $0x48] sm:$0xff] 0
        %243 = vst [vmem:[#allocation3 + $0x50] sm:$0xf] 0
        %244 = vst [vmem:[#allocation3 + $0x54] sm:$0xff] 0
        %245 = vst [vmem:[#allocation3 + $0x5c] sm:$0xf] 0
        %246 = vst [vmem:[#allocation3 + $0x60] sm:$0xff] 0
        %247 = vst [vmem:[#allocation3 + $0x68] sm:$0xf] 0
        %248 = vst [vmem:[#allocation3 + $0x6c] sm:$0xff] 0
        %249 = vst [vmem:[#allocation3 + $0x74] sm:$0xf] 0
        %250 = vst [vmem:[#allocation3 + $0x78] sm:$0xff] 0
        %251 = vst [vmem:[#allocation3 + $0x80] sm:$0xf] 0
        %252 = vst [vmem:[#allocation3 + $0x84] sm:$0xff] 0
        %253 = vst [vmem:[#allocation3 + $0x8c] sm:$0xf] 0
        %254 = vst [vmem:[#allocation3 + $0x90] sm:$0xff] 0
        %255 = vst [vmem:[#allocation3 + $0x98] sm:$0xf] 0
        %256 = vst [vmem:[#allocation3 + $0x9c] sm:$0xff] 0
        %257 = vst [vmem:[#allocation3 + $0xa4] sm:$0xf] 0
        %258 = vst [vmem:[#allocation3 + $0xa8] sm:$0xff] 0
        %259 = vst [vmem:[#allocation3 + $0xb0] sm:$0xf] 0
        %260 = vst [vmem:[#allocation3 + $0xb4] sm:$0xff] 0
        %261 = vst [vmem:[#allocation3 + $0xbc] sm:$0xf] 0
        %262 = vst [vmem:[#allocation3 + $0xc0] sm:$0xff] 0
        %263 = vst [vmem:[#allocation3 + $0xc8] sm:$0xf] 0
        %264 = vst [vmem:[#allocation3 + $0xcc] sm:$0xff] 0
        %265 = vst [vmem:[#allocation3 + $0xd4] sm:$0xf] 0
        %v266 = vld [vmem:[%s1] sm:$0x7]
        %v267 = vld [vmem:[%s2] sm:$0xff]
        %v268 = vld [vmem:[%s2 + $0x8] sm:$0xff]
        %v269 = vld [vmem:[%s2 + $0x10] sm:$0xff]
        %v270 = vld [vmem:[%s2 + $0x18] sm:$0xff]
        %v271 = vld [vmem:[%s2 + $0x20] sm:$0xff]
        %v272 = vld [vmem:[%s2 + $0x28] sm:$0xff]
        %v273 = vld [vmem:[%s2 + $0x30] sm:$0xff]
        %v274 = vld [vmem:[%s2 + $0x38] sm:$0xff]
        %v275 = vld [vmem:[%s2 + $0x40] sm:$0xff]
        %v276 = vld [vmem:[%s2 + $0x48] sm:$0xff]
        %v277 = vld [vmem:[%s2 + $0x50] sm:$0xff]
        %v278 = vld [vmem:[%s2 + $0x58] sm:$0xff]
        %v279 = vld [vmem:[%s2 + $0x60] sm:$0xff]
        %v280 = vld [vmem:[%s2 + $0x68] sm:$0xff]
        %v281 = vld [vmem:[%s2 + $0x70] sm:$0xff]
        %v282 = vld [vmem:[%s2 + $0x78] sm:$0xff]
        %v283 = vld [vmem:[%s2 + $0x80] sm:$0xff]
        %v284 = vld [vmem:[%s2 + $0x88] sm:$0xff]
        %v285 = vld [vmem:[%s2 + $0x90] sm:$0xff]
        %v286 = vld [vmem:[%s2 + $0x98] sm:$0xff]
        %v287 = vld [vmem:[%s2 + $0xa0] sm:$0xff]
        %v288 = vld [vmem:[%s2 + $0xa8] sm:$0xff]
        %v289 = vld [vmem:[%s2 + $0xb0] sm:$0xff]
        %v290 = vld [vmem:[%s2 + $0xb8] sm:$0xff]
        %v291 = vld [vmem:[%s2 + $0xc0] sm:$0xff]
        %v292 = vld [vmem:[%s2 + $0xc8] sm:$0xff]
        %v293 = vld [vmem:[%s2 + $0xd0] sm:$0xff]
        %v294 = vld [vmem:[%s2 + $0xd8] sm:$0xff]
        %v295 = vld [vmem:[%s2 + $0xe0] sm:$0xff]
        %v296 = vld [vmem:[%s2 + $0xe8] sm:$0xff]
        %v297 = vld [vmem:[%s2 + $0xf0] sm:$0xff]
        %v298 = vld [vmem:[%s2 + $0xf8] sm:$0xff]
        %v299 = vld [vmem:[%s2 + $0x100] sm:$0xff]
        %v300 = vld [vmem:[%s2 + $0x108] sm:$0xff]
        %v301 = vld [vmem:[%s2 + $0x110] sm:$0xff]
        %v302 = vld [vmem:[%s2 + $0x118] sm:$0xff]
        %v303 = vld [vmem:[%s2 + $0x120] sm:$0xff]
        %v304 = vld [vmem:[%s2 + $0x128] sm:$0xff]
        %v305 = vld [vmem:[%s2 + $0x130] sm:$0xff]
        %v306 = vld [vmem:[%s2 + $0x138] sm:$0xff]
        %v307 = vld [vmem:[%s2 + $0x140] sm:$0xff]
        %v308 = vld [vmem:[%s2 + $0x148] sm:$0xff]
        %v309 = vld [vmem:[%s2 + $0x150] sm:$0xff]
        %v310 = vld [vmem:[%s2 + $0x158] sm:$0xff]
        %v311 = vld [vmem:[%s2 + $0x160] sm:$0xff]
        %v312 = vld [vmem:[%s2 + $0x168] sm:$0xff]
        %v313 = vld [vmem:[%s2 + $0x170] sm:$0xff]
        %v314 = vld [vmem:[%s2 + $0x178] sm:$0xff]
        %v315 = vld [vmem:[%s3] sm:$0xff]
        %v316 = vld [vmem:[%s3 + $0x8] sm:$0x33]
        %v317 = vld [vmem:[%s4] sm:$0xf]
        %v318 = vld [vmem:[%s222] sm:$0xff]
        %v319 = vld [vmem:[%s222 + $0x8] sm:$0xff]
        %v320 = vld [vmem:[%s222 + $0x10] sm:$0xff]
        %v321 = vld [vmem:[%s222 + $0x18] sm:$0xff]
        %v322 = vld [vmem:[%s222 + $0x20] sm:$0xf]
        %v323 = vld [vmem:[%s222 + $0x28] sm:$0xf]
        %v324 = vld [vmem:[%s222 + $0x30] sm:$0xf]
        %v325 = vld [vmem:[%s222 + $0x38] sm:$0xf]
        %v326 = vpack.c.bf16 %v322, %v318
        %v327 = vpack.c.bf16 %v323, %v319
        %v328 = vpack.c.bf16 %v324, %v320
        %v329 = vpack.c.bf16 %v325, %v321
        %v334 = vunpack.c.l.b16 %v326
        %v335 = vunpack.c.l.b16 %v327
        %v336 = vunpack.c.l.b16 %v328
        %v337 = vunpack.c.l.b16 %v329
        %v338 = vunpack.c.h.b16 %v326
        %v339 = vunpack.c.h.b16 %v327
        %v340 = vunpack.c.h.b16 %v328
        %v341 = vunpack.c.h.b16 %v329
        %v342 = vpack.c.b16 %v335, %v334
        %v343 = vpack.c.b16 %v337, %v336
        %v344 = vpack.c.b16 %v339, %v338
        %v345 = vpack.c.b16 %v341, %v340
        %346 = vrot.lane.b32.xlu0 %v342, 123
        %v347 = vpop.permute.xlu0 %346
        %348 = vrot.lane.b32.xlu0 %v343, 123
        %v349 = vpop.permute.xlu0 %348
        %350 = vrot.lane.b32.xlu0 %v344, 123
        %v351 = vpop.permute.xlu0 %350
        %352 = vrot.lane.b32.xlu0 %v345, 123
        %v353 = vpop.permute.xlu0 %352
        %v354 = vrot.slane %v347, 4
        %v355 = vrot.slane %v349, 4
        %v356 = vrot.slane %v351, 4
        %v357 = vrot.slane %v353, 4
        %vm358 = vcmask 1043456
        %v359 = vsel %vm358, %v354, %v355
        %vm360 = vcmask 1006592
        %v361 = vsel %vm360, %v347, %v359
        %v362 = vsel %vm360, %v349, %v355
        %v363 = vsel %vm358, %v356, %v357
        %v364 = vsel %vm360, %v351, %v363
        %v365 = vsel %vm360, %v353, %v357
        %370 = vst [vmem:[#allocation3] sm:$0xff] %v361
        %371 = vst [vmem:[#allocation3 + $0x8] sm:$0xf] %v362
        %372 = vst [vmem:[#allocation3 + $0xc] sm:$0x33] %v364
        %373 = vst [vmem:[#allocation3 + $0x14] sm:$0x3] %v365
        %v374 = vld [vmem:[%s222] sm:$0xff]
        %v375 = vld [vmem:[%s222 + $0x8] sm:$0xff]
        %v376 = vld [vmem:[%s222 + $0x10] sm:$0xff]
        %v377 = vld [vmem:[%s222 + $0x18] sm:$0xff]
        %v378 = vld [vmem:[%s222 + $0x20] sm:$0xf]
        %v379 = vld [vmem:[%s222 + $0x28] sm:$0xf]
        %v380 = vld [vmem:[%s222 + $0x30] sm:$0xf]
        %v381 = vld [vmem:[%s222 + $0x38] sm:$0xf]
        %v382 = vpack.c.bf16 %v378, %v374
        %v383 = vpack.c.bf16 %v379, %v375
        %v384 = vpack.c.bf16 %v380, %v376
        %v385 = vpack.c.bf16 %v381, %v377
        %v390 = vunpack.c.l.b16 %v382
        %v391 = vunpack.c.l.b16 %v383
        %v392 = vunpack.c.l.b16 %v384
        %v393 = vunpack.c.l.b16 %v385
        %v394 = vunpack.c.h.b16 %v382
        %v395 = vunpack.c.h.b16 %v383
        %v396 = vunpack.c.h.b16 %v384
        %v397 = vunpack.c.h.b16 %v385
        %v398 = vpack.c.b16 %v391, %v390
        %v399 = vpack.c.b16 %v393, %v392
        %v400 = vpack.c.b16 %v395, %v394
        %v401 = vpack.c.b16 %v397, %v396
        %402 = vrot.lane.b32.xlu0 %v398, 122
        %v403 = vpop.permute.xlu0 %402
        %404 = vrot.lane.b32.xlu0 %v399, 122
        %v405 = vpop.permute.xlu0 %404
        %406 = vrot.lane.b32.xlu0 %v400, 122
        %v407 = vpop.permute.xlu0 %406
        %408 = vrot.lane.b32.xlu0 %v401, 122
        %v409 = vpop.permute.xlu0 %408
        %v410 = vrot.slane %v403, 4
        %v411 = vrot.slane %v405, 4
        %v412 = vrot.slane %v407, 4
        %v413 = vrot.slane %v409, 4
        %v414 = vsel %vm358, %v410, %v411
        %vm415 = vcmask 998400
        %v416 = vsel %vm415, %v403, %v414
        %v417 = vsel %vm415, %v405, %v411
        %v418 = vsel %vm358, %v412, %v413
        %v419 = vsel %vm415, %v407, %v418
        %v420 = vsel %vm415, %v409, %v413
        %425 = vst [vmem:[#allocation3 + $0x18] sm:$0xff] %v416
        %426 = vst [vmem:[#allocation3 + $0x20] sm:$0xf] %v417
        %427 = vst [vmem:[#allocation3 + $0x24] sm:$0x33] %v419
        %428 = vst [vmem:[#allocation3 + $0x2c] sm:$0x3] %v420
        %v429 = vld [vmem:[%s222] sm:$0xff]
        %v430 = vld [vmem:[%s222 + $0x8] sm:$0xff]
        %v431 = vld [vmem:[%s222 + $0x10] sm:$0xff]
        %v432 = vld [vmem:[%s222 + $0x18] sm:$0xff]
        %v433 = vld [vmem:[%s222 + $0x20] sm:$0xf]
        %v434 = vld [vmem:[%s222 + $0x28] sm:$0xf]
        %v435 = vld [vmem:[%s222 + $0x30] sm:$0xf]
        %v436 = vld [vmem:[%s222 + $0x38] sm:$0xf]
        %v437 = vpack.c.bf16 %v433, %v429
        %v438 = vpack.c.bf16 %v434, %v430
        %v439 = vpack.c.bf16 %v435, %v431
        %v440 = vpack.c.bf16 %v436, %v432
        %v445 = vunpack.c.l.b16 %v437
        %v446 = vunpack.c.l.b16 %v438
        %v447 = vunpack.c.l.b16 %v439
        %v448 = vunpack.c.l.b16 %v440
        %v449 = vunpack.c.h.b16 %v437
        %v450 = vunpack.c.h.b16 %v438
        %v451 = vunpack.c.h.b16 %v439
        %v452 = vunpack.c.h.b16 %v440
        %v453 = vpack.c.b16 %v446, %v445
        %v454 = vpack.c.b16 %v448, %v447
        %v455 = vpack.c.b16 %v450, %v449
        %v456 = vpack.c.b16 %v452, %v451
        %457 = vrot.lane.b32.xlu0 %v453, 121
        %v458 = vpop.permute.xlu0 %457
        %459 = vrot.lane.b32.xlu0 %v454, 121
        %v460 = vpop.permute.xlu0 %459
        %461 = vrot.lane.b32.xlu0 %v455, 121
        %v462 = vpop.permute.xlu0 %461
        %463 = vrot.lane.b32.xlu0 %v456, 121
        %v464 = vpop.permute.xlu0 %463
        %v465 = vrot.slane %v458, 4
        %v466 = vrot.slane %v460, 4
        %v467 = vrot.slane %v462, 4
        %v468 = vrot.slane %v464, 4
        %v469 = vsel %vm358, %v465, %v466
        %vm470 = vcmask 990208
        %v471 = vsel %vm470, %v458, %v469
        %v472 = vsel %vm470, %v460, %v466
        %v473 = vsel %vm358, %v467, %v468
        %v474 = vsel %vm470, %v462, %v473
        %v475 = vsel %vm470, %v464, %v468
        %480 = vst [vmem:[#allocation3 + $0x30] sm:$0xff] %v471
        %481 = vst [vmem:[#allocation3 + $0x38] sm:$0xf] %v472
        %482 = vst [vmem:[#allocation3 + $0x3c] sm:$0x33] %v474
        %483 = vst [vmem:[#allocation3 + $0x44] sm:$0x3] %v475
        %v484 = vld [vmem:[%s222] sm:$0xff]
        %v485 = vld [vmem:[%s222 + $0x8] sm:$0xff]
        %v486 = vld [vmem:[%s222 + $0x10] sm:$0xff]
        %v487 = vld [vmem:[%s222 + $0x18] sm:$0xff]
        %v488 = vld [vmem:[%s222 + $0x20] sm:$0xf]
        %v489 = vld [vmem:[%s222 + $0x28] sm:$0xf]
        %v490 = vld [vmem:[%s222 + $0x30] sm:$0xf]
        %v491 = vld [vmem:[%s222 + $0x38] sm:$0xf]
        %v492 = vpack.c.bf16 %v488, %v484
        %v493 = vpack.c.bf16 %v489, %v485
        %v494 = vpack.c.bf16 %v490, %v486
        %v495 = vpack.c.bf16 %v491, %v487
        %v500 = vunpack.c.l.b16 %v492
        %v501 = vunpack.c.l.b16 %v493
        %v502 = vunpack.c.l.b16 %v494
        %v503 = vunpack.c.l.b16 %v495
        %v504 = vunpack.c.h.b16 %v492
        %v505 = vunpack.c.h.b16 %v493
        %v506 = vunpack.c.h.b16 %v494
        %v507 = vunpack.c.h.b16 %v495
        %v508 = vpack.c.b16 %v501, %v500
        %v509 = vpack.c.b16 %v503, %v502
        %v510 = vpack.c.b16 %v505, %v504
        %v511 = vpack.c.b16 %v507, %v506
        %512 = vrot.lane.b32.xlu0 %v508, 105
        %v513 = vpop.permute.xlu0 %512
        %514 = vrot.lane.b32.xlu0 %v509, 105
        %v515 = vpop.permute.xlu0 %514
        %516 = vrot.lane.b32.xlu0 %v510, 105
        %v517 = vpop.permute.xlu0 %516
        %518 = vrot.lane.b32.xlu0 %v511, 105
        %v519 = vpop.permute.xlu0 %518
        %v520 = vrot.slane %v513, 4
        %v521 = vrot.slane %v515, 4
        %v522 = vrot.slane %v517, 4
        %v523 = vrot.slane %v519, 4
        %v524 = vsel %vm358, %v520, %v521
        %vm525 = vcmask 859136
        %v526 = vsel %vm525, %v513, %v524
        %v527 = vsel %vm525, %v515, %v521
        %v528 = vsel %vm358, %v522, %v523
        %v529 = vsel %vm525, %v517, %v528
        %v530 = vsel %vm525, %v519, %v523
        %535 = vst [vmem:[#allocation3 + $0x48] sm:$0xff] %v526
        %536 = vst [vmem:[#allocation3 + $0x50] sm:$0xf] %v527
        %537 = vst [vmem:[#allocation3 + $0x54] sm:$0x33] %v529
        %538 = vst [vmem:[#allocation3 + $0x5c] sm:$0x3] %v530
        %v539 = vld [vmem:[%s222] sm:$0xff]
        %v540 = vld [vmem:[%s222 + $0x8] sm:$0xff]
        %v541 = vld [vmem:[%s222 + $0x10] sm:$0xff]
        %v542 = vld [vmem:[%s222 + $0x18] sm:$0xff]
        %v543 = vld [vmem:[%s222 + $0x20] sm:$0xf]
        %v544 = vld [vmem:[%s222 + $0x28] sm:$0xf]
        %v545 = vld [vmem:[%s222 + $0x30] sm:$0xf]
        %v546 = vld [vmem:[%s222 + $0x38] sm:$0xf]
        %v547 = vpack.c.bf16 %v543, %v539
        %v548 = vpack.c.bf16 %v544, %v540
        %v549 = vpack.c.bf16 %v545, %v541
        %v550 = vpack.c.bf16 %v546, %v542
        %v555 = vunpack.c.l.b16 %v547
        %v556 = vunpack.c.l.b16 %v548
        %v557 = vunpack.c.l.b16 %v549
        %v558 = vunpack.c.l.b16 %v550
        %v559 = vunpack.c.h.b16 %v547
        %v560 = vunpack.c.h.b16 %v548
        %v561 = vunpack.c.h.b16 %v549
        %v562 = vunpack.c.h.b16 %v550
        %v563 = vpack.c.b16 %v556, %v555
        %v564 = vpack.c.b16 %v558, %v557
        %v565 = vpack.c.b16 %v560, %v559
        %v566 = vpack.c.b16 %v562, %v561
        %567 = vrot.lane.b32.xlu0 %v563, 104
        %v568 = vpop.permute.xlu0 %567
        %569 = vrot.lane.b32.xlu0 %v564, 104
        %v570 = vpop.permute.xlu0 %569
        %571 = vrot.lane.b32.xlu0 %v565, 104
        %v572 = vpop.permute.xlu0 %571
        %573 = vrot.lane.b32.xlu0 %v566, 104
        %v574 = vpop.permute.xlu0 %573
        %v575 = vrot.slane %v568, 4
        %v576 = vrot.slane %v570, 4
        %v577 = vrot.slane %v572, 4
        %v578 = vrot.slane %v574, 4
        %v579 = vsel %vm358, %v575, %v576
        %vm580 = vcmask 850944
        %v581 = vsel %vm580, %v568, %v579
        %v582 = vsel %vm580, %v570, %v576
        %v583 = vsel %vm358, %v577, %v578
        %v584 = vsel %vm580, %v572, %v583
        %v585 = vsel %vm580, %v574, %v578
        %590 = vst [vmem:[#allocation3 + $0x60] sm:$0xff] %v581
        %591 = vst [vmem:[#allocation3 + $0x68] sm:$0xf] %v582
        %592 = vst [vmem:[#allocation3 + $0x6c] sm:$0x33] %v584
        %593 = vst [vmem:[#allocation3 + $0x74] sm:$0x3] %v585
        %v594 = vld [vmem:[%s222] sm:$0xff]
        %v595 = vld [vmem:[%s222 + $0x8] sm:$0xff]
        %v596 = vld [vmem:[%s222 + $0x10] sm:$0xff]
        %v597 = vld [vmem:[%s222 + $0x18] sm:$0xff]
        %v598 = vld [vmem:[%s222 + $0x20] sm:$0xf]
        %v599 = vld [vmem:[%s222 + $0x28] sm:$0xf]
        %v600 = vld [vmem:[%s222 + $0x30] sm:$0xf]
        %v601 = vld [vmem:[%s222 + $0x38] sm:$0xf]
        %v602 = vpack.c.bf16 %v598, %v594
        %v603 = vpack.c.bf16 %v599, %v595
        %v604 = vpack.c.bf16 %v600, %v596
        %v605 = vpack.c.bf16 %v601, %v597
        %v610 = vunpack.c.l.b16 %v602
        %v611 = vunpack.c.l.b16 %v603
        %v612 = vunpack.c.l.b16 %v604
        %v613 = vunpack.c.l.b16 %v605
        %v614 = vunpack.c.h.b16 %v602
        %v615 = vunpack.c.h.b16 %v603
        %v616 = vunpack.c.h.b16 %v604
        %v617 = vunpack.c.h.b16 %v605
        %v618 = vpack.c.b16 %v611, %v610
        %v619 = vpack.c.b16 %v613, %v612
        %v620 = vpack.c.b16 %v615, %v614
        %v621 = vpack.c.b16 %v617, %v616
        %622 = vrot.lane.b32.xlu0 %v618, 103
        %v623 = vpop.permute.xlu0 %622
        %624 = vrot.lane.b32.xlu0 %v619, 103
        %v625 = vpop.permute.xlu0 %624
        %626 = vrot.lane.b32.xlu0 %v620, 103
        %v627 = vpop.permute.xlu0 %626
        %628 = vrot.lane.b32.xlu0 %v621, 103
        %v629 = vpop.permute.xlu0 %628
        %v630 = vrot.slane %v623, 4
        %v631 = vrot.slane %v625, 4
        %v632 = vrot.slane %v627, 4
        %v633 = vrot.slane %v629, 4
        %v634 = vsel %vm358, %v630, %v631
        %vm635 = vcmask 842752
        %v636 = vsel %vm635, %v623, %v634
        %v637 = vsel %vm635, %v625, %v631
        %v638 = vsel %vm358, %v632, %v633
        %v639 = vsel %vm635, %v627, %v638
        %v640 = vsel %vm635, %v629, %v633
        %645 = vst [vmem:[#allocation3 + $0x78] sm:$0xff] %v636
        %646 = vst [vmem:[#allocation3 + $0x80] sm:$0xf] %v637
        %647 = vst [vmem:[#allocation3 + $0x84] sm:$0x33] %v639
        %648 = vst [vmem:[#allocation3 + $0x8c] sm:$0x3] %v640
        %v649 = vld [vmem:[%s222] sm:$0xff]
        %v650 = vld [vmem:[%s222 + $0x8] sm:$0xff]
        %v651 = vld [vmem:[%s222 + $0x10] sm:$0xff]
        %v652 = vld [vmem:[%s222 + $0x18] sm:$0xff]
        %v653 = vld [vmem:[%s222 + $0x20] sm:$0xf]
        %v654 = vld [vmem:[%s222 + $0x28] sm:$0xf]
        %v655 = vld [vmem:[%s222 + $0x30] sm:$0xf]
        %v656 = vld [vmem:[%s222 + $0x38] sm:$0xf]
        %v657 = vpack.c.bf16 %v653, %v649
        %v658 = vpack.c.bf16 %v654, %v650
        %v659 = vpack.c.bf16 %v655, %v651
        %v660 = vpack.c.bf16 %v656, %v652
        %v665 = vunpack.c.l.b16 %v657
        %v666 = vunpack.c.l.b16 %v658
        %v667 = vunpack.c.l.b16 %v659
        %v668 = vunpack.c.l.b16 %v660
        %v669 = vunpack.c.h.b16 %v657
        %v670 = vunpack.c.h.b16 %v658
        %v671 = vunpack.c.h.b16 %v659
        %v672 = vunpack.c.h.b16 %v660
        %v673 = vpack.c.b16 %v666, %v665
        %v674 = vpack.c.b16 %v668, %v667
        %v675 = vpack.c.b16 %v670, %v669
        %v676 = vpack.c.b16 %v672, %v671
        %677 = vrot.lane.b32.xlu0 %v673, 87
        %v678 = vpop.permute.xlu0 %677
        %679 = vrot.lane.b32.xlu0 %v674, 87
        %v680 = vpop.permute.xlu0 %679
        %681 = vrot.lane.b32.xlu0 %v675, 87
        %v682 = vpop.permute.xlu0 %681
        %683 = vrot.lane.b32.xlu0 %v676, 87
        %v684 = vpop.permute.xlu0 %683
        %v685 = vrot.slane %v678, 4
        %v686 = vrot.slane %v680, 4
        %v687 = vrot.slane %v682, 4
        %v688 = vrot.slane %v684, 4
        %v689 = vsel %vm358, %v685, %v686
        %vm690 = vcmask 711680
        %v691 = vsel %vm690, %v678, %v689
        %v692 = vsel %vm690, %v680, %v686
        %v693 = vsel %vm358, %v687, %v688
        %v694 = vsel %vm690, %v682, %v693
        %v695 = vsel %vm690, %v684, %v688
        %700 = vst [vmem:[#allocation3 + $0x90] sm:$0xff] %v691
        %701 = vst [vmem:[#allocation3 + $0x98] sm:$0xf] %v692
        %702 = vst [vmem:[#allocation3 + $0x9c] sm:$0x33] %v694
        %703 = vst [vmem:[#allocation3 + $0xa4] sm:$0x3] %v695
        %v704 = vld [vmem:[%s222] sm:$0xff]
        %v705 = vld [vmem:[%s222 + $0x8] sm:$0xff]
        %v706 = vld [vmem:[%s222 + $0x10] sm:$0xff]
        %v707 = vld [vmem:[%s222 + $0x18] sm:$0xff]
        %v708 = vld [vmem:[%s222 + $0x20] sm:$0xf]
        %v709 = vld [vmem:[%s222 + $0x28] sm:$0xf]
        %v710 = vld [vmem:[%s222 + $0x30] sm:$0xf]
        %v711 = vld [vmem:[%s222 + $0x38] sm:$0xf]
        %v712 = vpack.c.bf16 %v708, %v704
        %v713 = vpack.c.bf16 %v709, %v705
        %v714 = vpack.c.bf16 %v710, %v706
        %v715 = vpack.c.bf16 %v711, %v707
        %v720 = vunpack.c.l.b16 %v712
        %v721 = vunpack.c.l.b16 %v713
        %v722 = vunpack.c.l.b16 %v714
        %v723 = vunpack.c.l.b16 %v715
        %v724 = vunpack.c.h.b16 %v712
        %v725 = vunpack.c.h.b16 %v713
        %v726 = vunpack.c.h.b16 %v714
        %v727 = vunpack.c.h.b16 %v715
        %v728 = vpack.c.b16 %v721, %v720
        %v729 = vpack.c.b16 %v723, %v722
        %v730 = vpack.c.b16 %v725, %v724
        %v731 = vpack.c.b16 %v727, %v726
        %732 = vrot.lane.b32.xlu0 %v728, 86
        %v733 = vpop.permute.xlu0 %732
        %734 = vrot.lane.b32.xlu0 %v729, 86
        %v735 = vpop.permute.xlu0 %734
        %736 = vrot.lane.b32.xlu0 %v730, 86
        %v737 = vpop.permute.xlu0 %736
        %738 = vrot.lane.b32.xlu0 %v731, 86
        %v739 = vpop.permute.xlu0 %738
        %v740 = vrot.slane %v733, 4
        %v741 = vrot.slane %v735, 4
        %v742 = vrot.slane %v737, 4
        %v743 = vrot.slane %v739, 4
        %v744 = vsel %vm358, %v740, %v741
        %vm745 = vcmask 703488
        %v746 = vsel %vm745, %v733, %v744
        %v747 = vsel %vm745, %v735, %v741
        %v748 = vsel %vm358, %v742, %v743
        %v749 = vsel %vm745, %v737, %v748
        %v750 = vsel %vm745, %v739, %v743
        %755 = vst [vmem:[#allocation3 + $0xa8] sm:$0xff] %v746
        %756 = vst [vmem:[#allocation3 + $0xb0] sm:$0xf] %v747
        %757 = vst [vmem:[#allocation3 + $0xb4] sm:$0x33] %v749
        %758 = vst [vmem:[#allocation3 + $0xbc] sm:$0x3] %v750
        %v759 = vld [vmem:[%s222] sm:$0xff]
        %v760 = vld [vmem:[%s222 + $0x8] sm:$0xff]
        %v761 = vld [vmem:[%s222 + $0x10] sm:$0xff]
        %v762 = vld [vmem:[%s222 + $0x18] sm:$0xff]
        %v763 = vld [vmem:[%s222 + $0x20] sm:$0xf]
        %v764 = vld [vmem:[%s222 + $0x28] sm:$0xf]
        %v765 = vld [vmem:[%s222 + $0x30] sm:$0xf]
        %v766 = vld [vmem:[%s222 + $0x38] sm:$0xf]
        %v767 = vpack.c.bf16 %v763, %v759
        %v768 = vpack.c.bf16 %v764, %v760
        %v769 = vpack.c.bf16 %v765, %v761
        %v770 = vpack.c.bf16 %v766, %v762
        %v775 = vunpack.c.l.b16 %v767
        %v776 = vunpack.c.l.b16 %v768
        %v777 = vunpack.c.l.b16 %v769
        %v778 = vunpack.c.l.b16 %v770
        %v779 = vunpack.c.h.b16 %v767
        %v780 = vunpack.c.h.b16 %v768
        %v781 = vunpack.c.h.b16 %v769
        %v782 = vunpack.c.h.b16 %v770
        %v783 = vpack.c.b16 %v776, %v775
        %v784 = vpack.c.b16 %v778, %v777
        %v785 = vpack.c.b16 %v780, %v779
        %v786 = vpack.c.b16 %v782, %v781
        %787 = vrot.lane.b32.xlu0 %v783, 85
        %v788 = vpop.permute.xlu0 %787
        %789 = vrot.lane.b32.xlu0 %v784, 85
        %v790 = vpop.permute.xlu0 %789
        %791 = vrot.lane.b32.xlu0 %v785, 85
        %v792 = vpop.permute.xlu0 %791
        %793 = vrot.lane.b32.xlu0 %v786, 85
        %v794 = vpop.permute.xlu0 %793
        %v795 = vrot.slane %v788, 4
        %v796 = vrot.slane %v790, 4
        %v797 = vrot.slane %v792, 4
        %v798 = vrot.slane %v794, 4
        %v799 = vsel %vm358, %v795, %v796
        %vm800 = vcmask 695296
        %v801 = vsel %vm800, %v788, %v799
        %v802 = vsel %vm800, %v790, %v796
        %v803 = vsel %vm358, %v797, %v798
        %v804 = vsel %vm800, %v792, %v803
        %v805 = vsel %vm800, %v794, %v798
        %810 = vst [vmem:[#allocation3 + $0xc0] sm:$0xff] %v801
        %811 = vst [vmem:[#allocation3 + $0xc8] sm:$0xf] %v802
        %812 = vst [vmem:[#allocation3 + $0xcc] sm:$0x33] %v804
        %813 = vst [vmem:[#allocation3 + $0xd4] sm:$0x3] %v805
        %v814 = vld [vmem:[#allocation3] sm:$0xff]
        %v815 = vld [vmem:[#allocation3 + $0x8] sm:$0xf]
        %v816 = vld [vmem:[#allocation3 + $0xc] sm:$0xff]
        %v817 = vld [vmem:[#allocation3 + $0x14] sm:$0xf]
        %v818 = vld [vmem:[#allocation3 + $0x18] sm:$0xff]
        %v819 = vld [vmem:[#allocation3 + $0x20] sm:$0xf]
        %v820 = vld [vmem:[#allocation3 + $0x24] sm:$0xff]
        %v821 = vld [vmem:[#allocation3 + $0x2c] sm:$0xf]
        %v822 = vld [vmem:[#allocation3 + $0x30] sm:$0xff]
        %v823 = vld [vmem:[#allocation3 + $0x38] sm:$0xf]
        %v824 = vld [vmem:[#allocation3 + $0x3c] sm:$0xff]
        %v825 = vld [vmem:[#allocation3 + $0x44] sm:$0xf]
        %v826 = vld [vmem:[#allocation3 + $0x48] sm:$0xff]
        %v827 = vld [vmem:[#allocation3 + $0x50] sm:$0xf]
        %v828 = vld [vmem:[#allocation3 + $0x54] sm:$0xff]
        %v829 = vld [vmem:[#allocation3 + $0x5c] sm:$0xf]
        %v830 = vld [vmem:[#allocation3 + $0x60] sm:$0xff]
        %v831 = vld [vmem:[#allocation3 + $0x68] sm:$0xf]
        %v832 = vld [vmem:[#allocation3 + $0x6c] sm:$0xff]
        %v833 = vld [vmem:[#allocation3 + $0x74] sm:$0xf]
        %v834 = vld [vmem:[#allocation3 + $0x78] sm:$0xff]
        %v835 = vld [vmem:[#allocation3 + $0x80] sm:$0xf]
        %v836 = vld [vmem:[#allocation3 + $0x84] sm:$0xff]
        %v837 = vld [vmem:[#allocation3 + $0x8c] sm:$0xf]
        %v838 = vld [vmem:[#allocation3 + $0x90] sm:$0xff]
        %v839 = vld [vmem:[#allocation3 + $0x98] sm:$0xf]
        %v840 = vld [vmem:[#allocation3 + $0x9c] sm:$0xff]
        %v841 = vld [vmem:[#allocation3 + $0xa4] sm:$0xf]
        %v842 = vld [vmem:[#allocation3 + $0xa8] sm:$0xff]
        %v843 = vld [vmem:[#allocation3 + $0xb0] sm:$0xf]
        %v844 = vld [vmem:[#allocation3 + $0xb4] sm:$0xff]
        %v845 = vld [vmem:[#allocation3 + $0xbc] sm:$0xf]
        %v846 = vld [vmem:[#allocation3 + $0xc0] sm:$0xff]
        %v847 = vld [vmem:[#allocation3 + $0xc8] sm:$0xf]
        %v848 = vld [vmem:[#allocation3 + $0xcc] sm:$0xff]
        %v849 = vld [vmem:[#allocation3 + $0xd4] sm:$0xf]
        %v852 = vunpack.c.l.b16 %v315
        %v853 = vunpack.c.h.b16 %v315
        %v854 = vunpack.c.l.b16 %v316
        %v855 = vunpack.c.h.b16 %v316
        %v856 = vpack.c.b16 %v854, %v852
        %v857 = vpack.c.b16 %v855, %v853
        %v895 = vunpack.c.l.b16 %v814
        %v896 = vunpack.c.h.b16 %v814
        %v897 = vunpack.c.l.b16 %v815
        %v898 = vunpack.c.l.b16 %v816
        %v899 = vunpack.c.h.b16 %v816
        %v900 = vunpack.c.l.b16 %v817
        %v901 = vunpack.c.l.b16 %v818
        %v902 = vunpack.c.h.b16 %v818
        %v903 = vunpack.c.l.b16 %v819
        %v904 = vunpack.c.l.b16 %v820
        %v905 = vunpack.c.h.b16 %v820
        %v906 = vunpack.c.l.b16 %v821
        %v907 = vunpack.c.l.b16 %v822
        %v908 = vunpack.c.h.b16 %v822
        %v909 = vunpack.c.l.b16 %v823
        %v910 = vunpack.c.l.b16 %v824
        %v911 = vunpack.c.h.b16 %v824
        %v912 = vunpack.c.l.b16 %v825
        %v913 = vunpack.c.l.b16 %v826
        %v914 = vunpack.c.h.b16 %v826
        %v915 = vunpack.c.l.b16 %v827
        %v916 = vunpack.c.l.b16 %v828
        %v917 = vunpack.c.h.b16 %v828
        %v918 = vunpack.c.l.b16 %v829
        %v919 = vunpack.c.l.b16 %v830
        %v920 = vunpack.c.h.b16 %v830
        %v921 = vunpack.c.l.b16 %v831
        %v922 = vunpack.c.l.b16 %v832
        %v923 = vunpack.c.h.b16 %v832
        %v924 = vunpack.c.l.b16 %v833
        %v925 = vunpack.c.l.b16 %v834
        %v926 = vunpack.c.h.b16 %v834
        %v927 = vunpack.c.l.b16 %v835
        %v928 = vunpack.c.l.b16 %v836
        %v929 = vunpack.c.h.b16 %v836
        %v930 = vunpack.c.l.b16 %v837
        %v931 = vunpack.c.l.b16 %v838
        %v932 = vunpack.c.h.b16 %v838
        %v933 = vunpack.c.l.b16 %v839
        %v934 = vunpack.c.l.b16 %v840
        %v935 = vunpack.c.h.b16 %v840
        %v936 = vunpack.c.l.b16 %v841
        %v937 = vunpack.c.l.b16 %v842
        %v938 = vunpack.c.h.b16 %v842
        %v939 = vunpack.c.l.b16 %v843
        %v940 = vunpack.c.l.b16 %v844
        %v941 = vunpack.c.h.b16 %v844
        %v942 = vunpack.c.l.b16 %v845
        %v943 = vunpack.c.l.b16 %v846
        %v944 = vunpack.c.h.b16 %v846
        %v945 = vunpack.c.l.b16 %v847
        %v946 = vunpack.c.l.b16 %v848
        %v947 = vunpack.c.h.b16 %v848
        %v948 = vunpack.c.l.b16 %v849
        %v949 = vpack.c.b16 %v898, %v895
        %v950 = vpack.c.b16 %v899, %v896
        %v951 = vpack.c.b16 %v900, %v897
        %v952 = vpack.c.b16 %v904, %v901
        %v953 = vpack.c.b16 %v905, %v902
        %v954 = vpack.c.b16 %v906, %v903
        %v955 = vpack.c.b16 %v910, %v907
        %v956 = vpack.c.b16 %v911, %v908
        %v957 = vpack.c.b16 %v912, %v909
        %v958 = vpack.c.b16 %v916, %v913
        %v959 = vpack.c.b16 %v917, %v914
        %v960 = vpack.c.b16 %v918, %v915
        %v961 = vpack.c.b16 %v922, %v919
        %v962 = vpack.c.b16 %v923, %v920
        %v963 = vpack.c.b16 %v924, %v921
        %v964 = vpack.c.b16 %v928, %v925
        %v965 = vpack.c.b16 %v929, %v926
        %v966 = vpack.c.b16 %v930, %v927
        %v967 = vpack.c.b16 %v934, %v931
        %v968 = vpack.c.b16 %v935, %v932
        %v969 = vpack.c.b16 %v936, %v933
        %v970 = vpack.c.b16 %v940, %v937
        %v971 = vpack.c.b16 %v941, %v938
        %v972 = vpack.c.b16 %v942, %v939
        %v973 = vpack.c.b16 %v946, %v943
        %v974 = vpack.c.b16 %v947, %v944
        %v975 = vpack.c.b16 %v948, %v945
        %vm1003 = vcmask 130048
        %v1005 = vsel %vm1003, %v857, 0
        %1007 = vmatprep.subr.bf16.mxu0 %v971
        %1008 = vmatpush1.bf16.msra.mxu0 %v970
        %1009 = vmatprep.subr.bf16.mxu0 %v968
        %1010 = vmatpush1.bf16.msra.mxu0 %v967
        %1011 = vmatprep.subr.bf16.mxu0 %v965
        %1012 = vmatpush1.bf16.msra.mxu0 %v964
        %1013 = vmatprep.subr.bf16.mxu0 %v962
        %1014 = vmatpush1.bf16.msra.mxu0 %v961
        %1015 = vmatprep.subr.bf16.mxu0 %v959
        %1016 = vmatpush1.bf16.msra.mxu0 %v958
        %1017 = vmatprep.subr.bf16.mxu0 %v956
        %1018 = vmatpush1.bf16.msra.mxu0 %v955
        %1019 = vmatprep.subr.bf16.mxu0 %v953
        %1020 = vmatpush1.bf16.msra.mxu0 %v952
        %1021 = vmatprep.subr.bf16.mxu0 %v950
        %1022 = vmatpush1.bf16.msra.mxu0 %v949
        %1023 = vmatprep.subr.bf16.mxu0 0
        %1024 = vmatpush2.bf16.msra.mxu0 0
        %1025 = vmatprep.subr.bf16.mxu0 0
        %1026 = vmatpush2.bf16.msra.mxu0 0
        %1027 = vmatprep.subr.bf16.mxu0 0
        %1028 = vmatpush2.bf16.msra.mxu0 0
        %1029 = vmatprep.subr.bf16.mxu0 0
        %1030 = vmatpush2.bf16.msra.mxu0 0
        %1031 = vmatprep.subr.bf16.mxu0 0
        %1032 = vmatpush2.bf16.msra.mxu0 0
        %1033 = vmatprep.subr.bf16.mxu0 0
        %1034 = vmatpush2.bf16.msra.mxu0 0
        %1035 = vmatprep.subr.bf16.mxu0 0
        %1036 = vmatpush2.bf16.msra.mxu0 0
        %1037 = vmatprep.subr.bf16.mxu0 %v974
        %1038 = vmatpush2.bf16.msra.mxu0 %v973
        %1039 = vmatprep.mubr.bf16.mxu0 %v1005
        %1040 = vmatmul.mubr.bf16.gmra.mxu0 %v856
        %v1041 = vpop.f32.mrf.mxu0
        %v1042 = vadd.f32 0.0, %v1041
        %v1043 = vpop.f32.mrf.mxu0
        %v1044 = vadd.f32 0.0, %v1043
        %v1045 = vpop.f32.mrf.mxu0
        %v1046 = vadd.f32 0.0, %v1045
        %v1047 = vpop.f32.mrf.mxu0
        %v1048 = vadd.f32 0.0, %v1047
        %1049 = vdwg.mxu0
        %1050 = vmatprep.subr.bf16.mxu0 0
        %1051 = vmatpush1.bf16.msra.mxu0 %v972
        %1052 = vmatprep.subr.bf16.mxu0 0
        %1053 = vmatpush1.bf16.msra.mxu0 %v969
        %1054 = vmatprep.subr.bf16.mxu0 0
        %1055 = vmatpush1.bf16.msra.mxu0 %v966
        %1056 = vmatprep.subr.bf16.mxu0 0
        %1057 = vmatpush1.bf16.msra.mxu0 %v963
        %1058 = vmatprep.subr.bf16.mxu0 0
        %1059 = vmatpush1.bf16.msra.mxu0 %v960
        %1060 = vmatprep.subr.bf16.mxu0 0
        %1061 = vmatpush1.bf16.msra.mxu0 %v957
        %1062 = vmatprep.subr.bf16.mxu0 0
        %1063 = vmatpush1.bf16.msra.mxu0 %v954
        %1064 = vmatprep.subr.bf16.mxu0 0
        %1065 = vmatpush1.bf16.msra.mxu0 %v951
        %1066 = vmatprep.subr.bf16.mxu0 0
        %1067 = vmatpush2.bf16.msra.mxu0 0
        %1068 = vmatprep.subr.bf16.mxu0 0
        %1069 = vmatpush2.bf16.msra.mxu0 0
        %1070 = vmatprep.subr.bf16.mxu0 0
        %1071 = vmatpush2.bf16.msra.mxu0 0
        %1072 = vmatprep.subr.bf16.mxu0 0
        %1073 = vmatpush2.bf16.msra.mxu0 0
        %1074 = vmatprep.subr.bf16.mxu0 0
        %1075 = vmatpush2.bf16.msra.mxu0 0
        %1076 = vmatprep.subr.bf16.mxu0 0
        %1077 = vmatpush2.bf16.msra.mxu0 0
        %1078 = vmatprep.subr.bf16.mxu0 0
        %1079 = vmatpush2.bf16.msra.mxu0 0
        %1080 = vmatprep.subr.bf16.mxu0 0
        %1081 = vmatpush2.bf16.msra.mxu0 %v975
        %1082 = vmatprep.mubr.bf16.mxu0 %v1005
        %1083 = vmatmul.mubr.bf16.gmra.mxu0 %v856
        %v1084 = vpop.f32.mrf.mxu0
        %v1085 = vadd.f32 0.0, %v1084
        %v1086 = vpop.f32.mrf.mxu0
        %v1087 = vpop.f32.mrf.mxu0
        %v1088 = vadd.f32 0.0, %v1087
        %v1089 = vpop.f32.mrf.mxu0
        %1090 = vdwg.mxu0
        %1091 = vmatprep.subr.mxu0 0.0
        %1092 = vmatpush1.msra.mxu0 %v282
        %1093 = vmatprep.subr.mxu0 0.0
        %1094 = vmatpush1.msra.mxu0 %v281
        %1095 = vmatprep.subr.mxu0 0.0
        %1096 = vmatpush1.msra.mxu0 %v280
        %1097 = vmatprep.subr.mxu0 0.0
        %1098 = vmatpush1.msra.mxu0 %v279
        %1099 = vmatprep.subr.mxu0 0.0
        %1100 = vmatpush1.msra.mxu0 %v278
        %1101 = vmatprep.subr.mxu0 0.0
        %1102 = vmatpush1.msra.mxu0 %v277
        %1103 = vmatprep.subr.mxu0 0.0
        %1104 = vmatpush1.msra.mxu0 %v276
        %1105 = vmatprep.subr.mxu0 0.0
        %1106 = vmatpush1.msra.mxu0 %v275
        %1107 = vmatprep.subr.mxu0 0.0
        %1108 = vmatpush1.msra.mxu0 %v274
        %1109 = vmatprep.subr.mxu0 0.0
        %1110 = vmatpush1.msra.mxu0 %v273
        %1111 = vmatprep.subr.mxu0 0.0
        %1112 = vmatpush1.msra.mxu0 %v272
        %1113 = vmatprep.subr.mxu0 0.0
        %1114 = vmatpush1.msra.mxu0 %v271
        %1115 = vmatprep.subr.mxu0 0.0
        %1116 = vmatpush1.msra.mxu0 %v270
        %1117 = vmatprep.subr.mxu0 0.0
        %1118 = vmatpush1.msra.mxu0 %v269
        %1119 = vmatprep.subr.mxu0 0.0
        %1120 = vmatpush1.msra.mxu0 %v268
        %1121 = vmatprep.subr.mxu0 0.0
        %1122 = vmatpush1.msra.mxu0 %v267
        %1123 = vmatprep.subr.mxu0 0.0
        %1124 = vmatpush2.msra.mxu0 %v298
        %1125 = vmatprep.subr.mxu0 0.0
        %1126 = vmatpush2.msra.mxu0 %v297
        %1127 = vmatprep.subr.mxu0 0.0
        %1128 = vmatpush2.msra.mxu0 %v296
        %1129 = vmatprep.subr.mxu0 0.0
        %1130 = vmatpush2.msra.mxu0 %v295
        %1131 = vmatprep.subr.mxu0 0.0
        %1132 = vmatpush2.msra.mxu0 %v294
        %1133 = vmatprep.subr.mxu0 0.0
        %1134 = vmatpush2.msra.mxu0 %v293
        %1135 = vmatprep.subr.mxu0 0.0
        %1136 = vmatpush2.msra.mxu0 %v292
        %1137 = vmatprep.subr.mxu0 0.0
        %1138 = vmatpush2.msra.mxu0 %v291
        %1139 = vmatprep.subr.mxu0 0.0
        %1140 = vmatpush2.msra.mxu0 %v290
        %1141 = vmatprep.subr.mxu0 0.0
        %1142 = vmatpush2.msra.mxu0 %v289
        %1143 = vmatprep.subr.mxu0 0.0
        %1144 = vmatpush2.msra.mxu0 %v288
        %1145 = vmatprep.subr.mxu0 0.0
        %1146 = vmatpush2.msra.mxu0 %v287
        %1147 = vmatprep.subr.mxu0 0.0
        %1148 = vmatpush2.msra.mxu0 %v286
        %1149 = vmatprep.subr.mxu0 0.0
        %1150 = vmatpush2.msra.mxu0 %v285
        %1151 = vmatprep.subr.mxu0 0.0
        %1152 = vmatpush2.msra.mxu0 %v284
        %1153 = vmatprep.subr.mxu0 0.0
        %1154 = vmatpush2.msra.mxu0 %v283
        %1155 = vmatprep.mubr.f32.mxu0 %v1044
        %1156 = vmatmul.mubr.f32.gmra.mxu0 %v1042
        %v1157 = vpop.f32.mrf.mxu0
        %v1158 = vadd.f32 0.0, %v1157
        %v1159 = vpop.f32.mrf.mxu0
        %1160 = vmatprep.mubr.f32.mxu0 %v1048
        %1161 = vmatmul.mubr.f32.gmra.mxu0 %v1046
        %v1162 = vpop.f32.mrf.mxu0
        %v1163 = vadd.f32 0.0, %v1162
        %v1164 = vpop.f32.mrf.mxu0
        %1165 = vdwg.mxu0
        %1166 = vmatprep.subr.mxu0 0.0
        %1167 = vmatpush1.msra.mxu0 %v314
        %1168 = vmatprep.subr.mxu0 0.0
        %1169 = vmatpush1.msra.mxu0 %v313
        %1170 = vmatprep.subr.mxu0 0.0
        %1171 = vmatpush1.msra.mxu0 %v312
        %1172 = vmatprep.subr.mxu0 0.0
        %1173 = vmatpush1.msra.mxu0 %v311
        %1174 = vmatprep.subr.mxu0 0.0
        %1175 = vmatpush1.msra.mxu0 %v310
        %1176 = vmatprep.subr.mxu0 0.0
        %1177 = vmatpush1.msra.mxu0 %v309
        %1178 = vmatprep.subr.mxu0 0.0
        %1179 = vmatpush1.msra.mxu0 %v308
        %1180 = vmatprep.subr.mxu0 0.0
        %1181 = vmatpush1.msra.mxu0 %v307
        %1182 = vmatprep.subr.mxu0 0.0
        %1183 = vmatpush1.msra.mxu0 %v306
        %1184 = vmatprep.subr.mxu0 0.0
        %1185 = vmatpush1.msra.mxu0 %v305
        %1186 = vmatprep.subr.mxu0 0.0
        %1187 = vmatpush1.msra.mxu0 %v304
        %1188 = vmatprep.subr.mxu0 0.0
        %1189 = vmatpush1.msra.mxu0 %v303
        %1190 = vmatprep.subr.mxu0 0.0
        %1191 = vmatpush1.msra.mxu0 %v302
        %1192 = vmatprep.subr.mxu0 0.0
        %1193 = vmatpush1.msra.mxu0 %v301
        %1194 = vmatprep.subr.mxu0 0.0
        %1195 = vmatpush1.msra.mxu0 %v300
        %1196 = vmatprep.subr.mxu0 0.0
        %1197 = vmatpush1.msra.mxu0 %v299
        %1198 = vmatprep.subr.mxu0 0.0
        %1199 = vmatpush2.msra.mxu0 0.0
        %1200 = vmatprep.subr.mxu0 0.0
        %1201 = vmatpush2.msra.mxu0 0.0
        %1202 = vmatprep.subr.mxu0 0.0
        %1203 = vmatpush2.msra.mxu0 0.0
        %1204 = vmatprep.subr.mxu0 0.0
        %1205 = vmatpush2.msra.mxu0 0.0
        %1206 = vmatprep.subr.mxu0 0.0
        %1207 = vmatpush2.msra.mxu0 0.0
        %1208 = vmatprep.subr.mxu0 0.0
        %1209 = vmatpush2.msra.mxu0 0.0
        %1210 = vmatprep.subr.mxu0 0.0
        %1211 = vmatpush2.msra.mxu0 0.0
        %1212 = vmatprep.subr.mxu0 0.0
        %1213 = vmatpush2.msra.mxu0 0.0
        %1214 = vmatprep.subr.mxu0 0.0
        %1215 = vmatpush2.msra.mxu0 0.0
        %1216 = vmatprep.subr.mxu0 0.0
        %1217 = vmatpush2.msra.mxu0 0.0
        %1218 = vmatprep.subr.mxu0 0.0
        %1219 = vmatpush2.msra.mxu0 0.0
        %1220 = vmatprep.subr.mxu0 0.0
        %1221 = vmatpush2.msra.mxu0 0.0
        %1222 = vmatprep.subr.mxu0 0.0
        %1223 = vmatpush2.msra.mxu0 0.0
        %1224 = vmatprep.subr.mxu0 0.0
        %1225 = vmatpush2.msra.mxu0 0.0
        %1226 = vmatprep.subr.mxu0 0.0
        %1227 = vmatpush2.msra.mxu0 0.0
        %1228 = vmatprep.subr.mxu0 0.0
        %1229 = vmatpush2.msra.mxu0 0.0
        %1230 = vmatprep.mubr.f32.mxu0 0.0
        %1231 = vmatmul.mubr.f32.gmra.mxu0 %v1085
        %v1232 = vpop.f32.mrf.mxu0
        %v1233 = vadd.f32 %v1158, %v1232
        %v1234 = vpop.f32.mrf.mxu0
        %1235 = vmatprep.mubr.f32.mxu0 0.0
        %1236 = vmatmul.mubr.f32.gmra.mxu0 %v1088
        %v1237 = vpop.f32.mrf.mxu0
        %v1238 = vadd.f32 %v1163, %v1237
        %v1239 = vpop.f32.mrf.mxu0
        %1240 = vdwg.mxu0
        %v1241 = vmul.f32 %v1042, %v1042
        %v1242 = vmul.f32 %v1044, %v1044
        %v1243 = vmul.f32 %v1085, %v1085
        %v1244 = vmul.f32 %v1046, %v1046
        %v1245 = vmul.f32 %v1048, %v1048
        %v1246 = vmul.f32 %v1088, %v1088
        %1247 = vmatprep.subr.mxu0 0.0
        %1248 = vmatpush1.msra.mxu0 %v282
        %1249 = vmatprep.subr.mxu0 0.0
        %1250 = vmatpush1.msra.mxu0 %v281
        %1251 = vmatprep.subr.mxu0 0.0
        %1252 = vmatpush1.msra.mxu0 %v280
        %1253 = vmatprep.subr.mxu0 0.0
        %1254 = vmatpush1.msra.mxu0 %v279
        %1255 = vmatprep.subr.mxu0 0.0
        %1256 = vmatpush1.msra.mxu0 %v278
        %1257 = vmatprep.subr.mxu0 0.0
        %1258 = vmatpush1.msra.mxu0 %v277
        %1259 = vmatprep.subr.mxu0 0.0
        %1260 = vmatpush1.msra.mxu0 %v276
        %1261 = vmatprep.subr.mxu0 0.0
        %1262 = vmatpush1.msra.mxu0 %v275
        %1263 = vmatprep.subr.mxu0 0.0
        %1264 = vmatpush1.msra.mxu0 %v274
        %1265 = vmatprep.subr.mxu0 0.0
        %1266 = vmatpush1.msra.mxu0 %v273
        %1267 = vmatprep.subr.mxu0 0.0
        %1268 = vmatpush1.msra.mxu0 %v272
        %1269 = vmatprep.subr.mxu0 0.0
        %1270 = vmatpush1.msra.mxu0 %v271
        %1271 = vmatprep.subr.mxu0 0.0
        %1272 = vmatpush1.msra.mxu0 %v270
        %1273 = vmatprep.subr.mxu0 0.0
        %1274 = vmatpush1.msra.mxu0 %v269
        %1275 = vmatprep.subr.mxu0 0.0
        %1276 = vmatpush1.msra.mxu0 %v268
        %1277 = vmatprep.subr.mxu0 0.0
        %1278 = vmatpush1.msra.mxu0 %v267
        %1279 = vmatprep.subr.mxu0 0.0
        %1280 = vmatpush2.msra.mxu0 %v298
        %1281 = vmatprep.subr.mxu0 0.0
        %1282 = vmatpush2.msra.mxu0 %v297
        %1283 = vmatprep.subr.mxu0 0.0
        %1284 = vmatpush2.msra.mxu0 %v296
        %1285 = vmatprep.subr.mxu0 0.0
        %1286 = vmatpush2.msra.mxu0 %v295
        %1287 = vmatprep.subr.mxu0 0.0
        %1288 = vmatpush2.msra.mxu0 %v294
        %1289 = vmatprep.subr.mxu0 0.0
        %1290 = vmatpush2.msra.mxu0 %v293
        %1291 = vmatprep.subr.mxu0 0.0
        %1292 = vmatpush2.msra.mxu0 %v292
        %1293 = vmatprep.subr.mxu0 0.0
        %1294 = vmatpush2.msra.mxu0 %v291
        %1295 = vmatprep.subr.mxu0 0.0
        %1296 = vmatpush2.msra.mxu0 %v290
        %1297 = vmatprep.subr.mxu0 0.0
        %1298 = vmatpush2.msra.mxu0 %v289
        %1299 = vmatprep.subr.mxu0 0.0
        %1300 = vmatpush2.msra.mxu0 %v288
        %1301 = vmatprep.subr.mxu0 0.0
        %1302 = vmatpush2.msra.mxu0 %v287
        %1303 = vmatprep.subr.mxu0 0.0
        %1304 = vmatpush2.msra.mxu0 %v286
        %1305 = vmatprep.subr.mxu0 0.0
        %1306 = vmatpush2.msra.mxu0 %v285
        %1307 = vmatprep.subr.mxu0 0.0
        %1308 = vmatpush2.msra.mxu0 %v284
        %1309 = vmatprep.subr.mxu0 0.0
        %1310 = vmatpush2.msra.mxu0 %v283
        %1311 = vmatprep.mubr.f32.mxu0 %v1242
        %1312 = vmatmul.mubr.f32.gmra.mxu0 %v1241
        %v1313 = vpop.f32.mrf.mxu0
        %v1314 = vadd.f32 0.0, %v1313
        %v1315 = vpop.f32.mrf.mxu0
        %1316 = vmatprep.mubr.f32.mxu0 %v1245
        %1317 = vmatmul.mubr.f32.gmra.mxu0 %v1244
        %v1318 = vpop.f32.mrf.mxu0
        %v1319 = vadd.f32 0.0, %v1318
        %v1320 = vpop.f32.mrf.mxu0
        %1321 = vdwg.mxu0
        %1322 = vmatprep.subr.mxu0 0.0
        %1323 = vmatpush1.msra.mxu0 %v314
        %1324 = vmatprep.subr.mxu0 0.0
        %1325 = vmatpush1.msra.mxu0 %v313
        %1326 = vmatprep.subr.mxu0 0.0
        %1327 = vmatpush1.msra.mxu0 %v312
        %1328 = vmatprep.subr.mxu0 0.0
        %1329 = vmatpush1.msra.mxu0 %v311
        %1330 = vmatprep.subr.mxu0 0.0
        %1331 = vmatpush1.msra.mxu0 %v310
        %1332 = vmatprep.subr.mxu0 0.0
        %1333 = vmatpush1.msra.mxu0 %v309
        %1334 = vmatprep.subr.mxu0 0.0
        %1335 = vmatpush1.msra.mxu0 %v308
        %1336 = vmatprep.subr.mxu0 0.0
        %1337 = vmatpush1.msra.mxu0 %v307
        %1338 = vmatprep.subr.mxu0 0.0
        %1339 = vmatpush1.msra.mxu0 %v306
        %1340 = vmatprep.subr.mxu0 0.0
        %1341 = vmatpush1.msra.mxu0 %v305
        %1342 = vmatprep.subr.mxu0 0.0
        %1343 = vmatpush1.msra.mxu0 %v304
        %1344 = vmatprep.subr.mxu0 0.0
        %1345 = vmatpush1.msra.mxu0 %v303
        %1346 = vmatprep.subr.mxu0 0.0
        %1347 = vmatpush1.msra.mxu0 %v302
        %1348 = vmatprep.subr.mxu0 0.0
        %1349 = vmatpush1.msra.mxu0 %v301
        %1350 = vmatprep.subr.mxu0 0.0
        %1351 = vmatpush1.msra.mxu0 %v300
        %1352 = vmatprep.subr.mxu0 0.0
        %1353 = vmatpush1.msra.mxu0 %v299
        %1354 = vmatprep.subr.mxu0 0.0
        %1355 = vmatpush2.msra.mxu0 0.0
        %1356 = vmatprep.subr.mxu0 0.0
        %1357 = vmatpush2.msra.mxu0 0.0
        %1358 = vmatprep.subr.mxu0 0.0
        %1359 = vmatpush2.msra.mxu0 0.0
        %1360 = vmatprep.subr.mxu0 0.0
        %1361 = vmatpush2.msra.mxu0 0.0
        %1362 = vmatprep.subr.mxu0 0.0
        %1363 = vmatpush2.msra.mxu0 0.0
        %1364 = vmatprep.subr.mxu0 0.0
        %1365 = vmatpush2.msra.mxu0 0.0
        %1366 = vmatprep.subr.mxu0 0.0
        %1367 = vmatpush2.msra.mxu0 0.0
        %1368 = vmatprep.subr.mxu0 0.0
        %1369 = vmatpush2.msra.mxu0 0.0
        %1370 = vmatprep.subr.mxu0 0.0
        %1371 = vmatpush2.msra.mxu0 0.0
        %1372 = vmatprep.subr.mxu0 0.0
        %1373 = vmatpush2.msra.mxu0 0.0
        %1374 = vmatprep.subr.mxu0 0.0
        %1375 = vmatpush2.msra.mxu0 0.0
        %1376 = vmatprep.subr.mxu0 0.0
        %1377 = vmatpush2.msra.mxu0 0.0
        %1378 = vmatprep.subr.mxu0 0.0
        %1379 = vmatpush2.msra.mxu0 0.0
        %1380 = vmatprep.subr.mxu0 0.0
        %1381 = vmatpush2.msra.mxu0 0.0
        %1382 = vmatprep.subr.mxu0 0.0
        %1383 = vmatpush2.msra.mxu0 0.0
        %1384 = vmatprep.subr.mxu0 0.0
        %1385 = vmatpush2.msra.mxu0 0.0
        %1386 = vmatprep.mubr.f32.mxu0 0.0
        %1387 = vmatmul.mubr.f32.gmra.mxu0 %v1243
        %v1388 = vpop.f32.mrf.mxu0
        %v1389 = vadd.f32 %v1314, %v1388
        %v1390 = vpop.f32.mrf.mxu0
        %1391 = vmatprep.mubr.f32.mxu0 0.0
        %1392 = vmatmul.mubr.f32.gmra.mxu0 %v1246
        %v1393 = vpop.f32.mrf.mxu0
        %v1394 = vadd.f32 %v1319, %v1393
        %v1395 = vpop.f32.mrf.mxu0
        %1396 = vdwg.mxu0
        %v1397 = vmul.f32 %v1233, 0.00390625
        %v1398 = vmul.f32 %v1238, 0.00390625
        %v1399 = vmul.f32 %v1389, 0.00390625
        %v1400 = vmul.f32 %v1394, 0.00390625
        %v1401 = vmul.f32 %v1397, %v1397
        %v1402 = vmul.f32 %v1398, %v1398
        %v1403 = vsub.f32 %v1399, %v1401
        %v1404 = vsub.f32 %v1400, %v1402
        %v1405 = vmax.f32 %v1403, 0.0
        %v1406 = vmax.f32 %v1404, 0.0
        %1408 = vset.pattern.permute.xlu0 0
        %1409 = vperm.xlu0 %1408, %v1397
        %v1410 = vpop.permute.xlu0 %1409
        %1413 = vset.pattern.permute.xlu0 0
        %1414 = vperm.xlu0 %1413, %v1398
        %v1415 = vpop.permute.xlu0 %1414
        %v1417 = vsub.f32 %v1042, %v1410
        %v1418 = vsub.f32 %v1044, %v1410
        %v1419 = vsub.f32 %v1085, %v1410
        %v1420 = vsub.f32 %v1046, %v1415
        %v1421 = vsub.f32 %v1048, %v1415
        %v1422 = vsub.f32 %v1088, %v1415
        %v1423 = vadd.f32 %v1405, 1e-05
        %v1424 = vadd.f32 %v1406, 1e-05
        %v1425 = vrsqrt.pop %v1423
        %v1426 = vrsqrt.pop %v1424
        %1428 = vset.pattern.permute.xlu0 0
        %1429 = vperm.xlu0 %1428, %v1425
        %v1430 = vpop.permute.xlu0 %1429
        %1433 = vset.pattern.permute.xlu0 0
        %1434 = vperm.xlu0 %1433, %v1426
        %v1435 = vpop.permute.xlu0 %1434
        %v1437 = vmul.f32 %v1417, %v1430
        %v1438 = vmul.f32 %v1418, %v1430
        %v1439 = vmul.f32 %v1419, %v1430
        %v1440 = vmul.f32 %v1420, %v1435
        %v1441 = vmul.f32 %v1421, %v1435
        %v1442 = vmul.f32 %v1422, %v1435
        %v1443 = vmax.f32 %v1437, 0.0
        %v1444 = vmax.f32 %v1438, 0.0
        %v1445 = vmax.f32 %v1439, 0.0
        %v1446 = vmax.f32 %v1440, 0.0
        %v1447 = vmax.f32 %v1441, 0.0
        %v1448 = vmax.f32 %v1442, 0.0
        %v1450 = vlaneseq
        %v1451 = vshrl.u32 %v1450, 7
        %v1452 = vsub.s32 0, %v1451
        %v1453 = vrot.slane %v266, %v1452
        %v1454 = vlaneseq
        %v1455 = vshrl.u32 %v1454, 7
        %v1456 = vsub.s32 1, %v1455
        %v1457 = vrot.slane %v266, %v1456
        %v1458 = vlaneseq
        %v1459 = vshrl.u32 %v1458, 7
        %v1460 = vsub.s32 2, %v1459
        %v1461 = vrot.slane %v266, %v1460
        %v1465 = vmul.f32 %v1443, %v1453
        %v1466 = vmul.f32 %v1444, %v1457
        %v1467 = vmul.f32 %v1445, %v1461
        %v1468 = vmul.f32 %v1446, %v1453
        %v1469 = vmul.f32 %v1447, %v1457
        %v1470 = vmul.f32 %v1448, %v1461
        %v1471 = vpack.c.bf16 %v1468, %v1465
        %v1472 = vpack.c.bf16 %v1469, %v1466
        %v1473 = vpack.c.bf16 %v1470, %v1467
        %v1477 = vunpack.c.l.b16 %v1471
        %v1478 = vunpack.c.l.b16 %v1472
        %v1479 = vunpack.c.l.b16 %v1473
        %v1480 = vunpack.c.h.b16 %v1471
        %v1481 = vunpack.c.h.b16 %v1472
        %v1482 = vunpack.c.h.b16 %v1473
        %v1483 = vpack.c.b16 %v1478, %v1477
        %v1484 = vpack.c.b16 %v1479, %v1479
        %v1485 = vpack.c.b16 %v1481, %v1480
        %v1486 = vpack.c.b16 %v1482, %v1482
        %1491 = vst [vmem:[#allocation2 + $0x4] sm:$0xff] %v1483
        %1492 = vst [vmem:[#allocation2 + $0xc] sm:$0xf] %v1484
        %1493 = vst [vmem:[#allocation2 + $0x18] sm:$0x33] %v1485
        %1494 = vst [vmem:[#allocation2 + $0x20] sm:$0x3] %v1486
        %v1495 = vld [vmem:[#allocation2] sm:$0xff]
        %v1496 = vld [vmem:[#allocation2 + $0x8] sm:$0xff]
        %v1497 = vld [vmem:[#allocation2 + $0x14] sm:$0x33]
        %v1498 = vld [vmem:[#allocation2 + $0x1c] sm:$0x33]
        %1503 = vrot.lane.b32.xlu0 %v1495, 19
        %v1504 = vpop.permute.xlu0 %1503
        %1505 = vrot.lane.b32.xlu0 %v1496, 19
        %v1506 = vpop.permute.xlu0 %1505
        %1507 = vrot.lane.b32.xlu0 %v1497, 19
        %v1508 = vpop.permute.xlu0 %1507
        %1509 = vrot.lane.b32.xlu0 %v1498, 19
        %v1510 = vpop.permute.xlu0 %1509
        %v1511 = vrot.slane %v1504, 4
        %v1512 = vrot.slane %v1506, 4
        %v1513 = vrot.slane %v1508, 4
        %v1514 = vrot.slane %v1510, 4
        %v1515 = vsel %vm358, %v1511, %v1512
        %vm1516 = vcmask 154624
        %v1517 = vsel %vm1516, %v1504, %v1515
        %v1518 = vsel %vm1516, %v1506, %v1512
        %v1519 = vsel %vm358, %v1513, %v1514
        %v1520 = vsel %vm1516, %v1508, %v1519
        %v1521 = vsel %vm1516, %v1510, %v1514
        %1526 = vst [vmem:[#allocation3] sm:$0xff] %v1517
        %1527 = vst [vmem:[#allocation3 + $0x8] sm:$0xf] %v1518
        %1528 = vst [vmem:[#allocation3 + $0xc] sm:$0x33] %v1520
        %1529 = vst [vmem:[#allocation3 + $0x14] sm:$0x3] %v1521
        %v1530 = vld [vmem:[#allocation2] sm:$0xff]
        %v1531 = vld [vmem:[#allocation2 + $0x8] sm:$0xff]
        %v1532 = vld [vmem:[#allocation2 + $0x14] sm:$0x33]
        %v1533 = vld [vmem:[#allocation2 + $0x1c] sm:$0x33]
        %1538 = vrot.lane.b32.xlu0 %v1530, 18
        %v1539 = vpop.permute.xlu0 %1538
        %1540 = vrot.lane.b32.xlu0 %v1531, 18
        %v1541 = vpop.permute.xlu0 %1540
        %1542 = vrot.lane.b32.xlu0 %v1532, 18
        %v1543 = vpop.permute.xlu0 %1542
        %1544 = vrot.lane.b32.xlu0 %v1533, 18
        %v1545 = vpop.permute.xlu0 %1544
        %v1546 = vrot.slane %v1539, 4
        %v1547 = vrot.slane %v1541, 4
        %v1548 = vrot.slane %v1543, 4
        %v1549 = vrot.slane %v1545, 4
        %v1550 = vsel %vm358, %v1546, %v1547
        %vm1551 = vcmask 146432
        %v1552 = vsel %vm1551, %v1539, %v1550
        %v1553 = vsel %vm1551, %v1541, %v1547
        %v1554 = vsel %vm358, %v1548, %v1549
        %v1555 = vsel %vm1551, %v1543, %v1554
        %v1556 = vsel %vm1551, %v1545, %v1549
        %1561 = vst [vmem:[#allocation3 + $0x18] sm:$0xff] %v1552
        %1562 = vst [vmem:[#allocation3 + $0x20] sm:$0xf] %v1553
        %1563 = vst [vmem:[#allocation3 + $0x24] sm:$0x33] %v1555
        %1564 = vst [vmem:[#allocation3 + $0x2c] sm:$0x3] %v1556
        %v1565 = vld [vmem:[#allocation2] sm:$0xff]
        %v1566 = vld [vmem:[#allocation2 + $0x8] sm:$0xff]
        %v1567 = vld [vmem:[#allocation2 + $0x14] sm:$0x33]
        %v1568 = vld [vmem:[#allocation2 + $0x1c] sm:$0x33]
        %1573 = vrot.lane.b32.xlu0 %v1565, 17
        %v1574 = vpop.permute.xlu0 %1573
        %1575 = vrot.lane.b32.xlu0 %v1566, 17
        %v1576 = vpop.permute.xlu0 %1575
        %1577 = vrot.lane.b32.xlu0 %v1567, 17
        %v1578 = vpop.permute.xlu0 %1577
        %1579 = vrot.lane.b32.xlu0 %v1568, 17
        %v1580 = vpop.permute.xlu0 %1579
        %v1581 = vrot.slane %v1574, 4
        %v1582 = vrot.slane %v1576, 4
        %v1583 = vrot.slane %v1578, 4
        %v1584 = vrot.slane %v1580, 4
        %v1585 = vsel %vm358, %v1581, %v1582
        %vm1586 = vcmask 138240
        %v1587 = vsel %vm1586, %v1574, %v1585
        %v1588 = vsel %vm1586, %v1576, %v1582
        %v1589 = vsel %vm358, %v1583, %v1584
        %v1590 = vsel %vm1586, %v1578, %v1589
        %v1591 = vsel %vm1586, %v1580, %v1584
        %1596 = vst [vmem:[#allocation3 + $0x30] sm:$0xff] %v1587
        %1597 = vst [vmem:[#allocation3 + $0x38] sm:$0xf] %v1588
        %1598 = vst [vmem:[#allocation3 + $0x3c] sm:$0x33] %v1590
        %1599 = vst [vmem:[#allocation3 + $0x44] sm:$0x3] %v1591
        %v1600 = vld [vmem:[#allocation2] sm:$0xff]
        %v1601 = vld [vmem:[#allocation2 + $0x8] sm:$0xff]
        %v1602 = vld [vmem:[#allocation2 + $0x14] sm:$0x33]
        %v1603 = vld [vmem:[#allocation2 + $0x1c] sm:$0x33]
        %1608 = vrot.lane.b32.xlu0 %v1600, 1
        %v1609 = vpop.permute.xlu0 %1608
        %1610 = vrot.lane.b32.xlu0 %v1601, 1
        %v1611 = vpop.permute.xlu0 %1610
        %1612 = vrot.lane.b32.xlu0 %v1602, 1
        %v1613 = vpop.permute.xlu0 %1612
        %1614 = vrot.lane.b32.xlu0 %v1603, 1
        %v1615 = vpop.permute.xlu0 %1614
        %v1616 = vrot.slane %v1609, 4
        %v1617 = vrot.slane %v1611, 4
        %v1618 = vrot.slane %v1613, 4
        %v1619 = vrot.slane %v1615, 4
        %v1620 = vsel %vm358, %v1616, %v1617
        %vm1621 = vcmask 7168
        %v1622 = vsel %vm1621, %v1609, %v1620
        %v1623 = vsel %vm1621, %v1611, %v1617
        %v1624 = vsel %vm358, %v1618, %v1619
        %v1625 = vsel %vm1621, %v1613, %v1624
        %v1626 = vsel %vm1621, %v1615, %v1619
        %1631 = vst [vmem:[#allocation3 + $0x48] sm:$0xff] %v1622
        %1632 = vst [vmem:[#allocation3 + $0x50] sm:$0xf] %v1623
        %1633 = vst [vmem:[#allocation3 + $0x54] sm:$0x33] %v1625
        %1634 = vst [vmem:[#allocation3 + $0x5c] sm:$0x3] %v1626
        %v1635 = vld [vmem:[#allocation2 + $0x4] sm:$0xff]
        %v1636 = vld [vmem:[#allocation2 + $0xc] sm:$0xf]
        %v1637 = vld [vmem:[#allocation2 + $0x18] sm:$0x33]
        %v1638 = vld [vmem:[#allocation2 + $0x20] sm:$0x3]
        %1639 = vst [vmem:[#allocation3 + $0x60] sm:$0xff] %v1635
        %1640 = vst [vmem:[#allocation3 + $0x68] sm:$0xf] %v1636
        %1641 = vst [vmem:[#allocation3 + $0x6c] sm:$0x33] %v1637
        %1642 = vst [vmem:[#allocation3 + $0x74] sm:$0x3] %v1638
        %v1643 = vld [vmem:[#allocation2 + $0x4] sm:$0xff]
        %v1644 = vld [vmem:[#allocation2 + $0xc] sm:$0xff]
        %v1645 = vld [vmem:[#allocation2 + $0x18] sm:$0x33]
        %v1646 = vld [vmem:[#allocation2 + $0x20] sm:$0x33]
        %1651 = vrot.lane.b32.xlu0 %v1643, 127
        %v1652 = vpop.permute.xlu0 %1651
        %1653 = vrot.lane.b32.xlu0 %v1644, 127
        %v1654 = vpop.permute.xlu0 %1653
        %1655 = vrot.lane.b32.xlu0 %v1645, 127
        %v1656 = vpop.permute.xlu0 %1655
        %1657 = vrot.lane.b32.xlu0 %v1646, 127
        %v1658 = vpop.permute.xlu0 %1657
        %v1659 = vrot.slane %v1652, 4
        %v1660 = vrot.slane %v1654, 4
        %v1661 = vrot.slane %v1656, 4
        %v1662 = vrot.slane %v1658, 4
        %v1663 = vsel %vm358, %v1659, %v1660
        %vm1664 = vcmask 1039360
        %v1665 = vsel %vm1664, %v1652, %v1663
        %v1666 = vsel %vm1664, %v1654, %v1660
        %v1667 = vsel %vm358, %v1661, %v1662
        %v1668 = vsel %vm1664, %v1656, %v1667
        %v1669 = vsel %vm1664, %v1658, %v1662
        %1674 = vst [vmem:[#allocation3 + $0x78] sm:$0xff] %v1665
        %1675 = vst [vmem:[#allocation3 + $0x80] sm:$0xf] %v1666
        %1676 = vst [vmem:[#allocation3 + $0x84] sm:$0x33] %v1668
        %1677 = vst [vmem:[#allocation3 + $0x8c] sm:$0x3] %v1669
        %v1678 = vld [vmem:[#allocation2 + $0x4] sm:$0xff]
        %v1679 = vld [vmem:[#allocation2 + $0xc] sm:$0xff]
        %v1680 = vld [vmem:[#allocation2 + $0x18] sm:$0x33]
        %v1681 = vld [vmem:[#allocation2 + $0x20] sm:$0x33]
        %1686 = vrot.lane.b32.xlu0 %v1678, 111
        %v1687 = vpop.permute.xlu0 %1686
        %1688 = vrot.lane.b32.xlu0 %v1679, 111
        %v1689 = vpop.permute.xlu0 %1688
        %1690 = vrot.lane.b32.xlu0 %v1680, 111
        %v1691 = vpop.permute.xlu0 %1690
        %1692 = vrot.lane.b32.xlu0 %v1681, 111
        %v1693 = vpop.permute.xlu0 %1692
        %v1694 = vrot.slane %v1687, 4
        %v1695 = vrot.slane %v1689, 4
        %v1696 = vrot.slane %v1691, 4
        %v1697 = vrot.slane %v1693, 4
        %v1698 = vsel %vm358, %v1694, %v1695
        %vm1699 = vcmask 908288
        %v1700 = vsel %vm1699, %v1687, %v1698
        %v1701 = vsel %vm1699, %v1689, %v1695
        %v1702 = vsel %vm358, %v1696, %v1697
        %v1703 = vsel %vm1699, %v1691, %v1702
        %v1704 = vsel %vm1699, %v1693, %v1697
        %1709 = vst [vmem:[#allocation3 + $0x90] sm:$0xff] %v1700
        %1710 = vst [vmem:[#allocation3 + $0x98] sm:$0xf] %v1701
        %1711 = vst [vmem:[#allocation3 + $0x9c] sm:$0x33] %v1703
        %1712 = vst [vmem:[#allocation3 + $0xa4] sm:$0x3] %v1704
        %v1713 = vld [vmem:[#allocation2 + $0x4] sm:$0xff]
        %v1714 = vld [vmem:[#allocation2 + $0xc] sm:$0xff]
        %v1715 = vld [vmem:[#allocation2 + $0x18] sm:$0x33]
        %v1716 = vld [vmem:[#allocation2 + $0x20] sm:$0x33]
        %1721 = vrot.lane.b32.xlu0 %v1713, 110
        %v1722 = vpop.permute.xlu0 %1721
        %1723 = vrot.lane.b32.xlu0 %v1714, 110
        %v1724 = vpop.permute.xlu0 %1723
        %1725 = vrot.lane.b32.xlu0 %v1715, 110
        %v1726 = vpop.permute.xlu0 %1725
        %1727 = vrot.lane.b32.xlu0 %v1716, 110
        %v1728 = vpop.permute.xlu0 %1727
        %v1729 = vrot.slane %v1722, 4
        %v1730 = vrot.slane %v1724, 4
        %v1731 = vrot.slane %v1726, 4
        %v1732 = vrot.slane %v1728, 4
        %v1733 = vsel %vm358, %v1729, %v1730
        %vm1734 = vcmask 900096
        %v1735 = vsel %vm1734, %v1722, %v1733
        %v1736 = vsel %vm1734, %v1724, %v1730
        %v1737 = vsel %vm358, %v1731, %v1732
        %v1738 = vsel %vm1734, %v1726, %v1737
        %v1739 = vsel %vm1734, %v1728, %v1732
        %1744 = vst [vmem:[#allocation3 + $0xa8] sm:$0xff] %v1735
        %1745 = vst [vmem:[#allocation3 + $0xb0] sm:$0xf] %v1736
        %1746 = vst [vmem:[#allocation3 + $0xb4] sm:$0x33] %v1738
        %1747 = vst [vmem:[#allocation3 + $0xbc] sm:$0x3] %v1739
        %v1748 = vld [vmem:[#allocation2 + $0x4] sm:$0xff]
        %v1749 = vld [vmem:[#allocation2 + $0xc] sm:$0xff]
        %v1750 = vld [vmem:[#allocation2 + $0x18] sm:$0x33]
        %v1751 = vld [vmem:[#allocation2 + $0x20] sm:$0x33]
        %1756 = vrot.lane.b32.xlu0 %v1748, 109
        %v1757 = vpop.permute.xlu0 %1756
        %1758 = vrot.lane.b32.xlu0 %v1749, 109
        %v1759 = vpop.permute.xlu0 %1758
        %1760 = vrot.lane.b32.xlu0 %v1750, 109
        %v1761 = vpop.permute.xlu0 %1760
        %1762 = vrot.lane.b32.xlu0 %v1751, 109
        %v1763 = vpop.permute.xlu0 %1762
        %v1764 = vrot.slane %v1757, 4
        %v1765 = vrot.slane %v1759, 4
        %v1766 = vrot.slane %v1761, 4
        %v1767 = vrot.slane %v1763, 4
        %v1768 = vsel %vm358, %v1764, %v1765
        %vm1769 = vcmask 891904
        %v1770 = vsel %vm1769, %v1757, %v1768
        %v1771 = vsel %vm1769, %v1759, %v1765
        %v1772 = vsel %vm358, %v1766, %v1767
        %v1773 = vsel %vm1769, %v1761, %v1772
        %v1774 = vsel %vm1769, %v1763, %v1767
        %1779 = vst [vmem:[#allocation3 + $0xc0] sm:$0xff] %v1770
        %1780 = vst [vmem:[#allocation3 + $0xc8] sm:$0xf] %v1771
        %1781 = vst [vmem:[#allocation3 + $0xcc] sm:$0x33] %v1773
        %1782 = vst [vmem:[#allocation3 + $0xd4] sm:$0x3] %v1774
        %v1783 = vld [vmem:[#allocation3] sm:$0xff]
        %v1784 = vld [vmem:[#allocation3 + $0x8] sm:$0xf]
        %v1785 = vld [vmem:[#allocation3 + $0xc] sm:$0xff]
        %v1786 = vld [vmem:[#allocation3 + $0x14] sm:$0xf]
        %v1787 = vld [vmem:[#allocation3 + $0x18] sm:$0xff]
        %v1788 = vld [vmem:[#allocation3 + $0x20] sm:$0xf]
        %v1789 = vld [vmem:[#allocation3 + $0x24] sm:$0xff]
        %v1790 = vld [vmem:[#allocation3 + $0x2c] sm:$0xf]
        %v1791 = vld [vmem:[#allocation3 + $0x30] sm:$0xff]
        %v1792 = vld [vmem:[#allocation3 + $0x38] sm:$0xf]
        %v1793 = vld [vmem:[#allocation3 + $0x3c] sm:$0xff]
        %v1794 = vld [vmem:[#allocation3 + $0x44] sm:$0xf]
        %v1795 = vld [vmem:[#allocation3 + $0x48] sm:$0xff]
        %v1796 = vld [vmem:[#allocation3 + $0x50] sm:$0xf]
        %v1797 = vld [vmem:[#allocation3 + $0x54] sm:$0xff]
        %v1798 = vld [vmem:[#allocation3 + $0x5c] sm:$0xf]
        %v1799 = vld [vmem:[#allocation3 + $0x60] sm:$0xff]
        %v1800 = vld [vmem:[#allocation3 + $0x68] sm:$0xf]
        %v1801 = vld [vmem:[#allocation3 + $0x6c] sm:$0xff]
        %v1802 = vld [vmem:[#allocation3 + $0x74] sm:$0xf]
        %v1803 = vld [vmem:[#allocation3 + $0x78] sm:$0xff]
        %v1804 = vld [vmem:[#allocation3 + $0x80] sm:$0xf]
        %v1805 = vld [vmem:[#allocation3 + $0x84] sm:$0xff]
        %v1806 = vld [vmem:[#allocation3 + $0x8c] sm:$0xf]
        %v1807 = vld [vmem:[#allocation3 + $0x90] sm:$0xff]
        %v1808 = vld [vmem:[#allocation3 + $0x98] sm:$0xf]
        %v1809 = vld [vmem:[#allocation3 + $0x9c] sm:$0xff]
        %v1810 = vld [vmem:[#allocation3 + $0xa4] sm:$0xf]
        %v1811 = vld [vmem:[#allocation3 + $0xa8] sm:$0xff]
        %v1812 = vld [vmem:[#allocation3 + $0xb0] sm:$0xf]
        %v1813 = vld [vmem:[#allocation3 + $0xb4] sm:$0xff]
        %v1814 = vld [vmem:[#allocation3 + $0xbc] sm:$0xf]
        %v1815 = vld [vmem:[#allocation3 + $0xc0] sm:$0xff]
        %v1816 = vld [vmem:[#allocation3 + $0xc8] sm:$0xf]
        %v1817 = vld [vmem:[#allocation3 + $0xcc] sm:$0xff]
        %v1818 = vld [vmem:[#allocation3 + $0xd4] sm:$0xf]
        %v1821 = vunpack.c.l.s4 1983009808
        %v1822 = vunpack.c.0.s8 %v1821
        %v1823 = vlaneseq
        %v1824 = vshrl.u32 %v1823, 7
        %v1825 = vsub.s32 %v1822, %v1824
        %v1826 = vrot.slane %v317, %v1825
        %v1827 = vcombine.high %v1826, %v1826
        %v1865 = vunpack.c.l.b16 %v1783
        %v1866 = vunpack.c.h.b16 %v1783
        %v1867 = vunpack.c.l.b16 %v1784
        %v1868 = vunpack.c.l.b16 %v1785
        %v1869 = vunpack.c.h.b16 %v1785
        %v1870 = vunpack.c.l.b16 %v1786
        %v1871 = vunpack.c.l.b16 %v1787
        %v1872 = vunpack.c.h.b16 %v1787
        %v1873 = vunpack.c.l.b16 %v1788
        %v1874 = vunpack.c.l.b16 %v1789
        %v1875 = vunpack.c.h.b16 %v1789
        %v1876 = vunpack.c.l.b16 %v1790
        %v1877 = vunpack.c.l.b16 %v1791
        %v1878 = vunpack.c.h.b16 %v1791
        %v1879 = vunpack.c.l.b16 %v1792
        %v1880 = vunpack.c.l.b16 %v1793
        %v1881 = vunpack.c.h.b16 %v1793
        %v1882 = vunpack.c.l.b16 %v1794
        %v1883 = vunpack.c.l.b16 %v1795
        %v1884 = vunpack.c.h.b16 %v1795
        %v1885 = vunpack.c.l.b16 %v1796
        %v1886 = vunpack.c.l.b16 %v1797
        %v1887 = vunpack.c.h.b16 %v1797
        %v1888 = vunpack.c.l.b16 %v1798
        %v1889 = vunpack.c.l.b16 %v1799
        %v1890 = vunpack.c.h.b16 %v1799
        %v1891 = vunpack.c.l.b16 %v1800
        %v1892 = vunpack.c.l.b16 %v1801
        %v1893 = vunpack.c.h.b16 %v1801
        %v1894 = vunpack.c.l.b16 %v1802
        %v1895 = vunpack.c.l.b16 %v1803
        %v1896 = vunpack.c.h.b16 %v1803
        %v1897 = vunpack.c.l.b16 %v1804
        %v1898 = vunpack.c.l.b16 %v1805
        %v1899 = vunpack.c.h.b16 %v1805
        %v1900 = vunpack.c.l.b16 %v1806
        %v1901 = vunpack.c.l.b16 %v1807
        %v1902 = vunpack.c.h.b16 %v1807
        %v1903 = vunpack.c.l.b16 %v1808
        %v1904 = vunpack.c.l.b16 %v1809
        %v1905 = vunpack.c.h.b16 %v1809
        %v1906 = vunpack.c.l.b16 %v1810
        %v1907 = vunpack.c.l.b16 %v1811
        %v1908 = vunpack.c.h.b16 %v1811
        %v1909 = vunpack.c.l.b16 %v1812
        %v1910 = vunpack.c.l.b16 %v1813
        %v1911 = vunpack.c.h.b16 %v1813
        %v1912 = vunpack.c.l.b16 %v1814
        %v1913 = vunpack.c.l.b16 %v1815
        %v1914 = vunpack.c.h.b16 %v1815
        %v1915 = vunpack.c.l.b16 %v1816
        %v1916 = vunpack.c.l.b16 %v1817
        %v1917 = vunpack.c.h.b16 %v1817
        %v1918 = vunpack.c.l.b16 %v1818
        %v1919 = vpack.c.b16 %v1868, %v1865
        %v1920 = vpack.c.b16 %v1869, %v1866
        %v1921 = vpack.c.b16 %v1870, %v1867
        %v1922 = vpack.c.b16 %v1874, %v1871
        %v1923 = vpack.c.b16 %v1875, %v1872
        %v1924 = vpack.c.b16 %v1876, %v1873
        %v1925 = vpack.c.b16 %v1880, %v1877
        %v1926 = vpack.c.b16 %v1881, %v1878
        %v1927 = vpack.c.b16 %v1882, %v1879
        %v1928 = vpack.c.b16 %v1886, %v1883
        %v1929 = vpack.c.b16 %v1887, %v1884
        %v1930 = vpack.c.b16 %v1888, %v1885
        %v1931 = vpack.c.b16 %v1892, %v1889
        %v1932 = vpack.c.b16 %v1893, %v1890
        %v1933 = vpack.c.b16 %v1894, %v1891
        %v1934 = vpack.c.b16 %v1898, %v1895
        %v1935 = vpack.c.b16 %v1899, %v1896
        %v1936 = vpack.c.b16 %v1900, %v1897
        %v1937 = vpack.c.b16 %v1904, %v1901
        %v1938 = vpack.c.b16 %v1905, %v1902
        %v1939 = vpack.c.b16 %v1906, %v1903
        %v1940 = vpack.c.b16 %v1910, %v1907
        %v1941 = vpack.c.b16 %v1911, %v1908
        %v1942 = vpack.c.b16 %v1912, %v1909
        %v1943 = vpack.c.b16 %v1916, %v1913
        %v1944 = vpack.c.b16 %v1917, %v1914
        %v1945 = vpack.c.b16 %v1918, %v1915
        %v1974 = vsel %vm1003, %v1827, 0
        %1976 = vmatprep.subr.bf16.mxu0 %v1941
        %1977 = vmatpush1.bf16.msra.mxu0 %v1940
        %1978 = vmatprep.subr.bf16.mxu0 %v1938
        %1979 = vmatpush1.bf16.msra.mxu0 %v1937
        %1980 = vmatprep.subr.bf16.mxu0 %v1935
        %1981 = vmatpush1.bf16.msra.mxu0 %v1934
        %1982 = vmatprep.subr.bf16.mxu0 %v1932
        %1983 = vmatpush1.bf16.msra.mxu0 %v1931
        %1984 = vmatprep.subr.bf16.mxu0 %v1929
        %1985 = vmatpush1.bf16.msra.mxu0 %v1928
        %1986 = vmatprep.subr.bf16.mxu0 %v1926
        %1987 = vmatpush1.bf16.msra.mxu0 %v1925
        %1988 = vmatprep.subr.bf16.mxu0 %v1923
        %1989 = vmatpush1.bf16.msra.mxu0 %v1922
        %1990 = vmatprep.subr.bf16.mxu0 %v1920
        %1991 = vmatpush1.bf16.msra.mxu0 %v1919
        %1992 = vmatprep.subr.bf16.mxu0 0
        %1993 = vmatpush2.bf16.msra.mxu0 0
        %1994 = vmatprep.subr.bf16.mxu0 0
        %1995 = vmatpush2.bf16.msra.mxu0 0
        %1996 = vmatprep.subr.bf16.mxu0 0
        %1997 = vmatpush2.bf16.msra.mxu0 0
        %1998 = vmatprep.subr.bf16.mxu0 0
        %1999 = vmatpush2.bf16.msra.mxu0 0
        %2000 = vmatprep.subr.bf16.mxu0 0
        %2001 = vmatpush2.bf16.msra.mxu0 0
        %2002 = vmatprep.subr.bf16.mxu0 0
        %2003 = vmatpush2.bf16.msra.mxu0 0
        %2004 = vmatprep.subr.bf16.mxu0 0
        %2005 = vmatpush2.bf16.msra.mxu0 0
        %2006 = vmatprep.subr.bf16.mxu0 %v1944
        %2007 = vmatpush2.bf16.msra.mxu0 %v1943
        %2008 = vmatprep.mubr.bf16.mxu0 %v1974
        %2009 = vmatmul.mubr.bf16.gmra.mxu0 %v1826
        %v2010 = vpop.f32.mrf.mxu0
        %v2011 = vadd.f32 0.0, %v2010
        %v2012 = vpop.f32.mrf.mxu0
        %v2013 = vadd.f32 0.0, %v2012
        %v2014 = vpop.f32.mrf.mxu0
        %v2015 = vpop.f32.mrf.mxu0
        %2016 = vdwg.mxu0
        %2017 = vmatprep.subr.bf16.mxu0 0
        %2018 = vmatpush1.bf16.msra.mxu0 %v1942
        %2019 = vmatprep.subr.bf16.mxu0 0
        %2020 = vmatpush1.bf16.msra.mxu0 %v1939
        %2021 = vmatprep.subr.bf16.mxu0 0
        %2022 = vmatpush1.bf16.msra.mxu0 %v1936
        %2023 = vmatprep.subr.bf16.mxu0 0
        %2024 = vmatpush1.bf16.msra.mxu0 %v1933
        %2025 = vmatprep.subr.bf16.mxu0 0
        %2026 = vmatpush1.bf16.msra.mxu0 %v1930
        %2027 = vmatprep.subr.bf16.mxu0 0
        %2028 = vmatpush1.bf16.msra.mxu0 %v1927
        %2029 = vmatprep.subr.bf16.mxu0 0
        %2030 = vmatpush1.bf16.msra.mxu0 %v1924
        %2031 = vmatprep.subr.bf16.mxu0 0
        %2032 = vmatpush1.bf16.msra.mxu0 %v1921
        %2033 = vmatprep.subr.bf16.mxu0 0
        %2034 = vmatpush2.bf16.msra.mxu0 0
        %2035 = vmatprep.subr.bf16.mxu0 0
        %2036 = vmatpush2.bf16.msra.mxu0 0
        %2037 = vmatprep.subr.bf16.mxu0 0
        %2038 = vmatpush2.bf16.msra.mxu0 0
        %2039 = vmatprep.subr.bf16.mxu0 0
        %2040 = vmatpush2.bf16.msra.mxu0 0
        %2041 = vmatprep.subr.bf16.mxu0 0
        %2042 = vmatpush2.bf16.msra.mxu0 0
        %2043 = vmatprep.subr.bf16.mxu0 0
        %2044 = vmatpush2.bf16.msra.mxu0 0
        %2045 = vmatprep.subr.bf16.mxu0 0
        %2046 = vmatpush2.bf16.msra.mxu0 0
        %2047 = vmatprep.subr.bf16.mxu0 0
        %2048 = vmatpush2.bf16.msra.mxu0 %v1945
        %2049 = vmatprep.mubr.bf16.mxu0 %v1974
        %2050 = vmatmul.mubr.bf16.gmra.mxu0 %v1826
        %v2051 = vpop.f32.mrf.mxu0
        %v2052 = vadd.f32 0.0, %v2051
        %v2053 = vpop.f32.mrf.mxu0
        %v2054 = vpop.f32.mrf.mxu0
        %v2055 = vpop.f32.mrf.mxu0
        %2056 = vdwg.mxu0
        %2057 = vmatprep.subr.mxu0 0.0
        %2058 = vmatpush1.msra.mxu0 %v282
        %2059 = vmatprep.subr.mxu0 0.0
        %2060 = vmatpush1.msra.mxu0 %v281
        %2061 = vmatprep.subr.mxu0 0.0
        %2062 = vmatpush1.msra.mxu0 %v280
        %2063 = vmatprep.subr.mxu0 0.0
        %2064 = vmatpush1.msra.mxu0 %v279
        %2065 = vmatprep.subr.mxu0 0.0
        %2066 = vmatpush1.msra.mxu0 %v278
        %2067 = vmatprep.subr.mxu0 0.0
        %2068 = vmatpush1.msra.mxu0 %v277
        %2069 = vmatprep.subr.mxu0 0.0
        %2070 = vmatpush1.msra.mxu0 %v276
        %2071 = vmatprep.subr.mxu0 0.0
        %2072 = vmatpush1.msra.mxu0 %v275
        %2073 = vmatprep.subr.mxu0 0.0
        %2074 = vmatpush1.msra.mxu0 %v274
        %2075 = vmatprep.subr.mxu0 0.0
        %2076 = vmatpush1.msra.mxu0 %v273
        %2077 = vmatprep.subr.mxu0 0.0
        %2078 = vmatpush1.msra.mxu0 %v272
        %2079 = vmatprep.subr.mxu0 0.0
        %2080 = vmatpush1.msra.mxu0 %v271
        %2081 = vmatprep.subr.mxu0 0.0
        %2082 = vmatpush1.msra.mxu0 %v270
        %2083 = vmatprep.subr.mxu0 0.0
        %2084 = vmatpush1.msra.mxu0 %v269
        %2085 = vmatprep.subr.mxu0 0.0
        %2086 = vmatpush1.msra.mxu0 %v268
        %2087 = vmatprep.subr.mxu0 0.0
        %2088 = vmatpush1.msra.mxu0 %v267
        %2089 = vmatprep.subr.mxu0 0.0
        %2090 = vmatpush2.msra.mxu0 %v298
        %2091 = vmatprep.subr.mxu0 0.0
        %2092 = vmatpush2.msra.mxu0 %v297
        %2093 = vmatprep.subr.mxu0 0.0
        %2094 = vmatpush2.msra.mxu0 %v296
        %2095 = vmatprep.subr.mxu0 0.0
        %2096 = vmatpush2.msra.mxu0 %v295
        %2097 = vmatprep.subr.mxu0 0.0
        %2098 = vmatpush2.msra.mxu0 %v294
        %2099 = vmatprep.subr.mxu0 0.0
        %2100 = vmatpush2.msra.mxu0 %v293
        %2101 = vmatprep.subr.mxu0 0.0
        %2102 = vmatpush2.msra.mxu0 %v292
        %2103 = vmatprep.subr.mxu0 0.0
        %2104 = vmatpush2.msra.mxu0 %v291
        %2105 = vmatprep.subr.mxu0 0.0
        %2106 = vmatpush2.msra.mxu0 %v290
        %2107 = vmatprep.subr.mxu0 0.0
        %2108 = vmatpush2.msra.mxu0 %v289
        %2109 = vmatprep.subr.mxu0 0.0
        %2110 = vmatpush2.msra.mxu0 %v288
        %2111 = vmatprep.subr.mxu0 0.0
        %2112 = vmatpush2.msra.mxu0 %v287
        %2113 = vmatprep.subr.mxu0 0.0
        %2114 = vmatpush2.msra.mxu0 %v286
        %2115 = vmatprep.subr.mxu0 0.0
        %2116 = vmatpush2.msra.mxu0 %v285
        %2117 = vmatprep.subr.mxu0 0.0
        %2118 = vmatpush2.msra.mxu0 %v284
        %2119 = vmatprep.subr.mxu0 0.0
        %2120 = vmatpush2.msra.mxu0 %v283
        %2121 = vmatprep.mubr.f32.mxu0 %v2013
        %2122 = vmatmul.mubr.f32.gmra.mxu0 %v2011
        %v2123 = vpop.f32.mrf.mxu0
        %v2124 = vadd.f32 0.0, %v2123
        %v2125 = vpop.f32.mrf.mxu0
        %2126 = vdwg.mxu0
        %2127 = vmatprep.subr.mxu0 0.0
        %2128 = vmatpush1.msra.mxu0 %v314
        %2129 = vmatprep.subr.mxu0 0.0
        %2130 = vmatpush1.msra.mxu0 %v313
        %2131 = vmatprep.subr.mxu0 0.0
        %2132 = vmatpush1.msra.mxu0 %v312
        %2133 = vmatprep.subr.mxu0 0.0
        %2134 = vmatpush1.msra.mxu0 %v311
        %2135 = vmatprep.subr.mxu0 0.0
        %2136 = vmatpush1.msra.mxu0 %v310
        %2137 = vmatprep.subr.mxu0 0.0
        %2138 = vmatpush1.msra.mxu0 %v309
        %2139 = vmatprep.subr.mxu0 0.0
        %2140 = vmatpush1.msra.mxu0 %v308
        %2141 = vmatprep.subr.mxu0 0.0
        %2142 = vmatpush1.msra.mxu0 %v307
        %2143 = vmatprep.subr.mxu0 0.0
        %2144 = vmatpush1.msra.mxu0 %v306
        %2145 = vmatprep.subr.mxu0 0.0
        %2146 = vmatpush1.msra.mxu0 %v305
        %2147 = vmatprep.subr.mxu0 0.0
        %2148 = vmatpush1.msra.mxu0 %v304
        %2149 = vmatprep.subr.mxu0 0.0
        %2150 = vmatpush1.msra.mxu0 %v303
        %2151 = vmatprep.subr.mxu0 0.0
        %2152 = vmatpush1.msra.mxu0 %v302
        %2153 = vmatprep.subr.mxu0 0.0
        %2154 = vmatpush1.msra.mxu0 %v301
        %2155 = vmatprep.subr.mxu0 0.0
        %2156 = vmatpush1.msra.mxu0 %v300
        %2157 = vmatprep.subr.mxu0 0.0
        %2158 = vmatpush1.msra.mxu0 %v299
        %2159 = vmatprep.subr.mxu0 0.0
        %2160 = vmatpush2.msra.mxu0 0.0
        %2161 = vmatprep.subr.mxu0 0.0
        %2162 = vmatpush2.msra.mxu0 0.0
        %2163 = vmatprep.subr.mxu0 0.0
        %2164 = vmatpush2.msra.mxu0 0.0
        %2165 = vmatprep.subr.mxu0 0.0
        %2166 = vmatpush2.msra.mxu0 0.0
        %2167 = vmatprep.subr.mxu0 0.0
        %2168 = vmatpush2.msra.mxu0 0.0
        %2169 = vmatprep.subr.mxu0 0.0
        %2170 = vmatpush2.msra.mxu0 0.0
        %2171 = vmatprep.subr.mxu0 0.0
        %2172 = vmatpush2.msra.mxu0 0.0
        %2173 = vmatprep.subr.mxu0 0.0
        %2174 = vmatpush2.msra.mxu0 0.0
        %2175 = vmatprep.subr.mxu0 0.0
        %2176 = vmatpush2.msra.mxu0 0.0
        %2177 = vmatprep.subr.mxu0 0.0
        %2178 = vmatpush2.msra.mxu0 0.0
        %2179 = vmatprep.subr.mxu0 0.0
        %2180 = vmatpush2.msra.mxu0 0.0
        %2181 = vmatprep.subr.mxu0 0.0
        %2182 = vmatpush2.msra.mxu0 0.0
        %2183 = vmatprep.subr.mxu0 0.0
        %2184 = vmatpush2.msra.mxu0 0.0
        %2185 = vmatprep.subr.mxu0 0.0
        %2186 = vmatpush2.msra.mxu0 0.0
        %2187 = vmatprep.subr.mxu0 0.0
        %2188 = vmatpush2.msra.mxu0 0.0
        %2189 = vmatprep.subr.mxu0 0.0
        %2190 = vmatpush2.msra.mxu0 0.0
        %2191 = vmatprep.mubr.f32.mxu0 0.0
        %2192 = vmatmul.mubr.f32.gmra.mxu0 %v2052
        %v2193 = vpop.f32.mrf.mxu0
        %v2194 = vadd.f32 %v2124, %v2193
        %v2195 = vpop.f32.mrf.mxu0
        %2196 = vdwg.mxu0
        %v2197 = vmul.f32 %v2011, %v2011
        %v2198 = vmul.f32 %v2013, %v2013
        %v2199 = vmul.f32 %v2052, %v2052
        %2200 = vmatprep.subr.mxu0 0.0
        %2201 = vmatpush1.msra.mxu0 %v282
        %2202 = vmatprep.subr.mxu0 0.0
        %2203 = vmatpush1.msra.mxu0 %v281
        %2204 = vmatprep.subr.mxu0 0.0
        %2205 = vmatpush1.msra.mxu0 %v280
        %2206 = vmatprep.subr.mxu0 0.0
        %2207 = vmatpush1.msra.mxu0 %v279
        %2208 = vmatprep.subr.mxu0 0.0
        %2209 = vmatpush1.msra.mxu0 %v278
        %2210 = vmatprep.subr.mxu0 0.0
        %2211 = vmatpush1.msra.mxu0 %v277
        %2212 = vmatprep.subr.mxu0 0.0
        %2213 = vmatpush1.msra.mxu0 %v276
        %2214 = vmatprep.subr.mxu0 0.0
        %2215 = vmatpush1.msra.mxu0 %v275
        %2216 = vmatprep.subr.mxu0 0.0
        %2217 = vmatpush1.msra.mxu0 %v274
        %2218 = vmatprep.subr.mxu0 0.0
        %2219 = vmatpush1.msra.mxu0 %v273
        %2220 = vmatprep.subr.mxu0 0.0
        %2221 = vmatpush1.msra.mxu0 %v272
        %2222 = vmatprep.subr.mxu0 0.0
        %2223 = vmatpush1.msra.mxu0 %v271
        %2224 = vmatprep.subr.mxu0 0.0
        %2225 = vmatpush1.msra.mxu0 %v270
        %2226 = vmatprep.subr.mxu0 0.0
        %2227 = vmatpush1.msra.mxu0 %v269
        %2228 = vmatprep.subr.mxu0 0.0
        %2229 = vmatpush1.msra.mxu0 %v268
        %2230 = vmatprep.subr.mxu0 0.0
        %2231 = vmatpush1.msra.mxu0 %v267
        %2232 = vmatprep.subr.mxu0 0.0
        %2233 = vmatpush2.msra.mxu0 %v298
        %2234 = vmatprep.subr.mxu0 0.0
        %2235 = vmatpush2.msra.mxu0 %v297
        %2236 = vmatprep.subr.mxu0 0.0
        %2237 = vmatpush2.msra.mxu0 %v296
        %2238 = vmatprep.subr.mxu0 0.0
        %2239 = vmatpush2.msra.mxu0 %v295
        %2240 = vmatprep.subr.mxu0 0.0
        %2241 = vmatpush2.msra.mxu0 %v294
        %2242 = vmatprep.subr.mxu0 0.0
        %2243 = vmatpush2.msra.mxu0 %v293
        %2244 = vmatprep.subr.mxu0 0.0
        %2245 = vmatpush2.msra.mxu0 %v292
        %2246 = vmatprep.subr.mxu0 0.0
        %2247 = vmatpush2.msra.mxu0 %v291
        %2248 = vmatprep.subr.mxu0 0.0
        %2249 = vmatpush2.msra.mxu0 %v290
        %2250 = vmatprep.subr.mxu0 0.0
        %2251 = vmatpush2.msra.mxu0 %v289
        %2252 = vmatprep.subr.mxu0 0.0
        %2253 = vmatpush2.msra.mxu0 %v288
        %2254 = vmatprep.subr.mxu0 0.0
        %2255 = vmatpush2.msra.mxu0 %v287
        %2256 = vmatprep.subr.mxu0 0.0
        %2257 = vmatpush2.msra.mxu0 %v286
        %2258 = vmatprep.subr.mxu0 0.0
        %2259 = vmatpush2.msra.mxu0 %v285
        %2260 = vmatprep.subr.mxu0 0.0
        %2261 = vmatpush2.msra.mxu0 %v284
        %2262 = vmatprep.subr.mxu0 0.0
        %2263 = vmatpush2.msra.mxu0 %v283
        %2264 = vmatprep.mubr.f32.mxu0 %v2198
        %2265 = vmatmul.mubr.f32.gmra.mxu0 %v2197
        %v2266 = vpop.f32.mrf.mxu0
        %v2267 = vadd.f32 0.0, %v2266
        %v2268 = vpop.f32.mrf.mxu0
        %2269 = vdwg.mxu0
        %2270 = vmatprep.subr.mxu0 0.0
        %2271 = vmatpush1.msra.mxu0 %v314
        %2272 = vmatprep.subr.mxu0 0.0
        %2273 = vmatpush1.msra.mxu0 %v313
        %2274 = vmatprep.subr.mxu0 0.0
        %2275 = vmatpush1.msra.mxu0 %v312
        %2276 = vmatprep.subr.mxu0 0.0
        %2277 = vmatpush1.msra.mxu0 %v311
        %2278 = vmatprep.subr.mxu0 0.0
        %2279 = vmatpush1.msra.mxu0 %v310
        %2280 = vmatprep.subr.mxu0 0.0
        %2281 = vmatpush1.msra.mxu0 %v309
        %2282 = vmatprep.subr.mxu0 0.0
        %2283 = vmatpush1.msra.mxu0 %v308
        %2284 = vmatprep.subr.mxu0 0.0
        %2285 = vmatpush1.msra.mxu0 %v307
        %2286 = vmatprep.subr.mxu0 0.0
        %2287 = vmatpush1.msra.mxu0 %v306
        %2288 = vmatprep.subr.mxu0 0.0
        %2289 = vmatpush1.msra.mxu0 %v305
        %2290 = vmatprep.subr.mxu0 0.0
        %2291 = vmatpush1.msra.mxu0 %v304
        %2292 = vmatprep.subr.mxu0 0.0
        %2293 = vmatpush1.msra.mxu0 %v303
        %2294 = vmatprep.subr.mxu0 0.0
        %2295 = vmatpush1.msra.mxu0 %v302
        %2296 = vmatprep.subr.mxu0 0.0
        %2297 = vmatpush1.msra.mxu0 %v301
        %2298 = vmatprep.subr.mxu0 0.0
        %2299 = vmatpush1.msra.mxu0 %v300
        %2300 = vmatprep.subr.mxu0 0.0
        %2301 = vmatpush1.msra.mxu0 %v299
        %2302 = vmatprep.subr.mxu0 0.0
        %2303 = vmatpush2.msra.mxu0 0.0
        %2304 = vmatprep.subr.mxu0 0.0
        %2305 = vmatpush2.msra.mxu0 0.0
        %2306 = vmatprep.subr.mxu0 0.0
        %2307 = vmatpush2.msra.mxu0 0.0
        %2308 = vmatprep.subr.mxu0 0.0
        %2309 = vmatpush2.msra.mxu0 0.0
        %2310 = vmatprep.subr.mxu0 0.0
        %2311 = vmatpush2.msra.mxu0 0.0
        %2312 = vmatprep.subr.mxu0 0.0
        %2313 = vmatpush2.msra.mxu0 0.0
        %2314 = vmatprep.subr.mxu0 0.0
        %2315 = vmatpush2.msra.mxu0 0.0
        %2316 = vmatprep.subr.mxu0 0.0
        %2317 = vmatpush2.msra.mxu0 0.0
        %2318 = vmatprep.subr.mxu0 0.0
        %2319 = vmatpush2.msra.mxu0 0.0
        %2320 = vmatprep.subr.mxu0 0.0
        %2321 = vmatpush2.msra.mxu0 0.0
        %2322 = vmatprep.subr.mxu0 0.0
        %2323 = vmatpush2.msra.mxu0 0.0
        %2324 = vmatprep.subr.mxu0 0.0
        %2325 = vmatpush2.msra.mxu0 0.0
        %2326 = vmatprep.subr.mxu0 0.0
        %2327 = vmatpush2.msra.mxu0 0.0
        %2328 = vmatprep.subr.mxu0 0.0
        %2329 = vmatpush2.msra.mxu0 0.0
        %2330 = vmatprep.subr.mxu0 0.0
        %2331 = vmatpush2.msra.mxu0 0.0
        %2332 = vmatprep.subr.mxu0 0.0
        %2333 = vmatpush2.msra.mxu0 0.0
        %2334 = vmatprep.mubr.f32.mxu0 0.0
        %2335 = vmatmul.mubr.f32.gmra.mxu0 %v2199
        %v2336 = vpop.f32.mrf.mxu0
        %v2337 = vadd.f32 %v2267, %v2336
        %v2338 = vpop.f32.mrf.mxu0
        %2339 = vdwg.mxu0
        %v2340 = vmul.f32 %v2194, 0.00390625
        %v2341 = vmul.f32 %v2337, 0.00390625
        %v2342 = vmul.f32 %v2340, %v2340
        %v2343 = vsub.f32 %v2341, %v2342
        %v2344 = vmax.f32 %v2343, 0.0
        %2346 = vset.pattern.permute.xlu0 0
        %2347 = vperm.xlu0 %2346, %v2340
        %v2348 = vpop.permute.xlu0 %2347
        %v2350 = vsub.f32 %v2011, %v2348
        %v2351 = vsub.f32 %v2013, %v2348
        %v2352 = vsub.f32 %v2052, %v2348
        %v2353 = vadd.f32 %v2344, 1e-05
        %v2354 = vrsqrt.pop %v2353
        %2356 = vset.pattern.permute.xlu0 0
        %2357 = vperm.xlu0 %2356, %v2354
        %v2358 = vpop.permute.xlu0 %2357
        %v2360 = vmul.f32 %v2350, %v2358
        %v2361 = vmul.f32 %v2351, %v2358
        %v2362 = vmul.f32 %v2352, %v2358
        %v2363 = vld [vmem:[%s222] sm:$0xf]
        %v2364 = vld [vmem:[%s222 + $0x8] sm:$0xf]
        %v2365 = vld [vmem:[%s222 + $0x10] sm:$0xf]
        %v2366 = vld [vmem:[%s222 + $0x18] sm:$0xf]
        %2371 = vrot.lane.b32.xlu0 %v2363, 104
        %v2372 = vpop.permute.xlu0 %2371
        %2373 = vrot.lane.b32.xlu0 %v2364, 104
        %v2374 = vpop.permute.xlu0 %2373
        %2375 = vrot.lane.b32.xlu0 %v2365, 104
        %v2376 = vpop.permute.xlu0 %2375
        %2377 = vrot.lane.b32.xlu0 %v2366, 104
        %v2378 = vpop.permute.xlu0 %2377
        %vm2379 = vcmask 850944
        %v2380 = vsel %vm2379, %v2372, %v2374
        %v2381 = vsel %vm2379, %v2374, %v2376
        %v2382 = vsel %vm2379, %v2376, %v2378
        %v2386 = vadd.f32 %v2360, %v2380
        %v2387 = vadd.f32 %v2361, %v2381
        %v2388 = vadd.f32 %v2362, %v2382
        %v2391 = vcombine.low %v2386, %v2387
        %2393 = vst [vmem:[%s217] sm:$0xff] %v2391
        %2394 = vst [vmem:[%s217 + $0x8] sm:$0xf] %v2388
        %s2395 = sand.u32 %s137, 1
        %s2396 = scalar_lea.sflag [#allocation5], %s2395
        %s2397 = sand.u32 %s137, 1
        %s2398 = smul.addr %s2397, 12
        %s2399 = scalar_lea.vmem [#allocation4], %s2398
        // Predicated region
        $region41: #{tpu_custom_call.1} parent=39 // pred_check
          %p2400 = pneg %p147
        $region42: #{tpu_custom_call.1} parent=39 // pred_check_branch
          %2402 = sbr.rel (%p2400) target = $region44
        $region43: #{tpu_custom_call.1} parent=39 // pred_region
          %s2404 = ssub.s32 192, 192
          %2405 = vsyncadd %s2396, %s2404
          %s2406 = smul.addr %s19, 3
          %s2407 = smul.addr %s2406, 64
          %s2408 = scalar_lea.hbm %s5, %s2407
          %s2410 = sshll.u32 %s2399, 4
          %s2411 = int_to_ptr.vmem [resolvable:$true] %s2410
          %2413 = dma.vmem_to_hbm [thread:$0]  %s2411, 192, %s2408, %s2396
        $region44: #{tpu_custom_call.1} parent=39 // pred_fallthru
          _
      $region40: #{tpu_custom_call.1} parent=5 // pred_fallthru
        _
      %p2414 = scmp.le.s32.totalorder 2, %s14
      // Predicated region
      $region45: #{tpu_custom_call.1} parent=5 // pred_check
        %p2415 = pneg %p2414
      $region46: #{tpu_custom_call.1} parent=5 // pred_check_branch
        %2417 = sbr.rel (%p2415) target = $region48
      $region47: #{tpu_custom_call.1} parent=5 // pred_region
        %s2418 = ssub.s32 %s14, 2
        // Predicated region
        $region49: #{tpu_custom_call.1} parent=47 // pred_check
          %p2419 = pneg %p153
        $region50: #{tpu_custom_call.1} parent=47 // pred_check_branch
          %2421 = sbr.rel (%p2419) target = $region52
        $region51: #{tpu_custom_call.1} parent=47 // pred_region
          %s2422 = sand.u32 %s138, 1
          %s2423 = scalar_lea.sflag [#allocation5], %s2422
          %s2424 = sand.u32 %s138, 1
          %s2425 = smul.addr %s2424, 12
          %s2426 = scalar_lea.vmem [#allocation4], %s2425
          %2427 = dma.done %s2423, 192
        $region52: #{tpu_custom_call.1} parent=47 // pred_fallthru
          _
      $region48: #{tpu_custom_call.1} parent=5 // pred_fallthru
        _
    $region6: #{tpu_custom_call.1} parent=1 // loop_footer
      %s18 = sadd.s32 1, %s14
    $region7: #{tpu_custom_call.1} parent=1 // loop_footer_branch
      %13 = sbr.rel target = $region3
    $region8: #{tpu_custom_call.1} parent=1 // loop_exit
      _
    %2428 = vsyncpa [#allocation5], 1
    %s2429 = scalar_lea.sflag [#allocation5], 1
    %2430 = vsyncpa %s2429, 1

</llo_original>
